<compile_context>
chip_gen: v7x
topology: tpu7x:2x2x1
jax: 0.10.0
libtpu: 0.0.40
codegen_flags: <defaults>
</compile_context>

<pallas_src>
import jax
import jax.numpy as jnp
from jax.experimental import pallas as pl
from jax.experimental.pallas import tpu as pltpu


# ---------------------------------------------------------------------------
# Config (small but consistent with the module: hidden=256 forced by pos_fc /
# time_fc; T = NCLIPS * FRAMES_PER_CLIP; conf hidden dim == T).
# ---------------------------------------------------------------------------
NCLIPS = 2
FRAMES_PER_CLIP = 4
T = NCLIPS * FRAMES_PER_CLIP          # number of frames / queries
HIDDEN = 256                          # cfg.MODEL.CG.HIDDEN (pos_fc hard-codes 256)
L_TEXT = 6                            # text sequence length
B = 1
LN_EPS = 1e-12

CONF_IN = 4                           # conf MLP input width
CONF_H = T                            # conf MLP hidden width

# ---- bf16 weight slab layout: (HIDDEN rows x W_COLS lanes) ------------------
WC_TIME = 0                           # time_fc Linear(256,256)       cols [0,256)
WC_HEAD = HIDDEN                      # [temp_w1 | act_w1]  (256,512) cols [256,768)
W_COLS = 3 * HIDDEN                   # 768 — exactly 6 aligned 128-lane tiles

# ---- merged f32 input slab layout: (SLAB_ROWS x HIDDEN) ---------------------
ROW_2D = 0                            # rows [0, T)          feat_2d
ROW_MO = T                            # rows [T, 2T)         feat_motion
ROW_TX = 2 * T                        # rows [2T, 2T+L)      feat_text
ROW_P = 2 * T + L_TEXT                # rows [22, 22+N_P)    small params, one vec/row

# param row offsets (relative to ROW_P)
R_POS_LN1_W, R_POS_LN1_B = 0, 1
R_TIME_LN1_W, R_TIME_LN1_B = 2, 3
R_TIME_LIN_B = 4
R_TIME_LN2_W, R_TIME_LN2_B = 5, 6
R_TEMP_B1, R_ACT_B1 = 7, 8
R_TEMP_W2_0, R_TEMP_W2_1, R_ACT_W2_0 = 9, 10, 11
R_POS_LIN_B, R_POS_LN2_W, R_POS_LN2_B = 12, 13, 14
R_CONF_B1, R_CONF_B2, R_CONF_B3 = 15, 16, 17
R_TEMP_B2, R_ACT_B2 = 18, 19
R_CONF_W1 = 20                        # rows 20..23  conf_w1[k, :]
R_CONF_W2 = R_CONF_W1 + CONF_IN       # rows 24..31  conf_w2[k, :]
R_CONF_W3 = R_CONF_W2 + CONF_H        # row  32      conf_w3[:, 0]
R_POS_W = R_CONF_W3 + 1               # rows 33..36  pos_lin_w[:, j] (transposed)
N_P_ROWS = R_POS_W + 4                # 37

SLAB_ROWS = 64                        # 22 + 37 = 59 -> pad to 64 sublanes
P_PAD_ROWS = SLAB_ROWS - ROW_P        # 42 param rows incl. padding

OUT_LANES = 128                       # packed output: [boxes4|sted2|conf1|act1|pad]


def _layernorm(x, w, b, eps=LN_EPS):
    """BertLayerNorm over the last axis (rsqrt -> EUP slot)."""
    mu = jnp.mean(x, axis=-1, keepdims=True)
    var = jnp.mean((x - mu) ** 2, axis=-1, keepdims=True)
    return (x - mu) * jax.lax.rsqrt(var + eps) * w + b


# ---------------------------------------------------------------------------
# Pallas kernel
# ---------------------------------------------------------------------------
def cgstvg_head_kernel(slab_ref, w_ref, out_ref):
    # ---- unpack the merged f32 slab with static slices -----------------------
    feat_2d = slab_ref[ROW_2D:ROW_2D + T, :]          # (T, H)  output_2d  (B squeezed)
    feat_mo = slab_ref[ROW_MO:ROW_MO + T, :]          # (T, H)  output_motion
    feat_tx = slab_ref[ROW_TX:ROW_TX + L_TEXT, :]     # (L, H)  output_text

    def prow(r, width=HIDDEN):
        return slab_ref[ROW_P + r:ROW_P + r + 1, 0:width]      # (1, width)

    def pcell(r, c):
        return slab_ref[ROW_P + r:ROW_P + r + 1, c:c + 1]      # (1, 1)

    # --- modality_concatenation ------------------------------------------------
    # mean over concat([2d(1,T,H), text broadcast (L,T,H), motion(1,T,H)], 0)
    text_sum = jnp.sum(feat_tx, axis=0, keepdims=True)                       # (1, H)
    frames_cls = (feat_2d + feat_mo + text_sum) / jnp.float32(L_TEXT + 2)    # (T, H)
    videos_cls = jnp.mean(frames_cls, axis=0, keepdims=True)                 # (1, H)

    # --- pos_fc: LN -> Linear(256,4) -> ReLU -> LN -> sigmoid -------------------
    # Linear(256,4) done as 4 f32 VPU multiply + lane reductions (weights live in
    # the f32 slab, so no bf16 drift on the box path).
    x = _layernorm(frames_cls, prow(R_POS_LN1_W), prow(R_POS_LN1_B))
    cols = [jnp.sum(x * prow(R_POS_W + j), axis=-1, keepdims=True) for j in range(4)]
    x4 = jnp.concatenate(cols, axis=-1) + prow(R_POS_LIN_B, 4)               # (T, 4)
    x4 = jnp.maximum(x4, 0.0)
    pos_query = jax.nn.sigmoid(
        _layernorm(x4, prow(R_POS_LN2_W, 4), prow(R_POS_LN2_B, 4)))          # (T, 4)

    # --- time_fc on the single videos_cls row (bf16 MXU, f32 accumulation) ------
    y = _layernorm(videos_cls, prow(R_TIME_LN1_W), prow(R_TIME_LN1_B))
    y = jnp.dot(y.astype(jnp.bfloat16), w_ref[:, WC_TIME:WC_TIME + HIDDEN],
                preferred_element_type=jnp.float32)
    y = jnp.maximum(y + prow(R_TIME_LIN_B), 0.0)
    content = _layernorm(y, prow(R_TIME_LN2_W), prow(R_TIME_LN2_B))          # (1, H)

    # --- temp_embed + action_embed, fused ---------------------------------------
    # layer-1: one (1,256)x(256,512) bf16 MXU matmul on the content row
    head_b = jnp.concatenate([prow(R_TEMP_B1), prow(R_ACT_B1)], axis=-1)     # (1, 512)
    h = jnp.dot(content.astype(jnp.bfloat16), w_ref[:, WC_HEAD:WC_HEAD + 2 * HIDDEN],
                preferred_element_type=jnp.float32) + head_b
    h = jnp.maximum(h, 0.0)
    h_temp = h[:, 0:HIDDEN]                                                  # (1, 256)
    h_act = h[:, HIDDEN:2 * HIDDEN]                                          # (1, 256)
    # layer-2: K=256, N<=2 — keep on VPU/XLU (f32); MXU round-trip would cost more
    sted0 = (jnp.sum(h_temp * prow(R_TEMP_W2_0), axis=-1, keepdims=True)
             + pcell(R_TEMP_B2, 0))
    sted1 = (jnp.sum(h_temp * prow(R_TEMP_W2_1), axis=-1, keepdims=True)
             + pcell(R_TEMP_B2, 1))
    act0 = (jnp.sum(h_act * prow(R_ACT_W2_0), axis=-1, keepdims=True)
            + pcell(R_ACT_B2, 0))
    # all T rows of the content query are identical -> broadcast the tiny results
    sted = jnp.broadcast_to(jnp.concatenate([sted0, sted1], axis=-1), (T, 2))
    act = jnp.broadcast_to(act0, (T, 1))

    # --- conf MLP(4, T, 1, 3), unrolled on the VPU (f32) -------------------------
    c = prow(R_CONF_B1, CONF_H)                                              # (1, T)
    for k in range(CONF_IN):
        c = c + pos_query[:, k:k + 1] * prow(R_CONF_W1 + k, CONF_H)
    c = jnp.maximum(c, 0.0)                                                  # (T, T)
    c2 = prow(R_CONF_B2, CONF_H)
    for k in range(CONF_H):
        c2 = c2 + c[:, k:k + 1] * prow(R_CONF_W2 + k, CONF_H)
    c2 = jnp.maximum(c2, 0.0)                                                # (T, T)
    c3 = (jnp.sum(c2 * prow(R_CONF_W3, CONF_H), axis=-1, keepdims=True)
          + pcell(R_CONF_B3, 0))
    conf_query = jax.nn.sigmoid(c3)                                          # (T, 1)

    # --- single lane-dense packed output ------------------------------------------
    pad = jnp.zeros((T, OUT_LANES - 8), jnp.float32)
    out_ref[...] = jnp.concatenate([pos_query, sted, conf_query, act, pad], axis=-1)


# ---------------------------------------------------------------------------
# Parameter construction / packing (packing done once, outside the jit path)
# ---------------------------------------------------------------------------
def make_params(key):
    """Deterministic synthetic parameters (linear weights stored as (in, out))."""
    ks = iter(jax.random.split(key, 32))
    w = lambda shape: jax.random.normal(next(ks), shape, jnp.float32) * 0.02
    g = lambda n: 1.0 + 0.02 * jax.random.normal(next(ks), (n,), jnp.float32)  # LN gamma
    b = lambda n: 0.02 * jax.random.normal(next(ks), (n,), jnp.float32)        # bias / beta
    return [
        # pos_fc: LN(256) -> Linear(256,4) -> ReLU -> LN(4)
        g(HIDDEN), b(HIDDEN), w((HIDDEN, 4)), b(4), g(4), b(4),
        # time_fc: LN(256) -> Linear(256,256) -> ReLU -> LN(256)
        g(HIDDEN), b(HIDDEN), w((HIDDEN, HIDDEN)), b(HIDDEN), g(HIDDEN), b(HIDDEN),
        # conf MLP(4, T, 1, 3)
        w((CONF_IN, CONF_H)), b(CONF_H), w((CONF_H, CONF_H)), b(CONF_H),
        w((CONF_H, 1)), b(1),
        # temp_embed MLP(256, 256, 2, 2)
        w((HIDDEN, HIDDEN)), b(HIDDEN), w((HIDDEN, 2)), b(2),
        # action_embed MLP(256, 256, 1, 2)
        w((HIDDEN, HIDDEN)), b(HIDDEN), w((HIDDEN, 1)), b(1),
    ]


def pack_params(params):
    """Pack the 26 parameter tensors into a bf16 weight slab and an f32 row slab."""
    (pos_ln1_w, pos_ln1_b, pos_lin_w, pos_lin_b, pos_ln2_w, pos_ln2_b,
     time_ln1_w, time_ln1_b, time_lin_w, time_lin_b, time_ln2_w, time_ln2_b,
     conf_w1, conf_b1, conf_w2, conf_b2, conf_w3, conf_b3,
     temp_w1, temp_b1, temp_w2, temp_b2,
     act_w1, act_b1, act_w2, act_b2) = params

    # big (input-dim 256) weights, lane-packed, stored bf16 (halves slab DMA)
    wslab = jnp.zeros((HIDDEN, W_COLS), jnp.float32)
    wslab = wslab.at[:, WC_TIME:WC_TIME + HIDDEN].set(time_lin_w)
    wslab = wslab.at[:, WC_HEAD:WC_HEAD + HIDDEN].set(temp_w1)
    wslab = wslab.at[:, WC_HEAD + HIDDEN:WC_HEAD + 2 * HIDDEN].set(act_w1)
    wslab = wslab.astype(jnp.bfloat16)

    def pad_row(v):
        v = jnp.asarray(v, jnp.float32).reshape(-1)
        return jnp.zeros((HIDDEN,), jnp.float32).at[:v.shape[0]].set(v)

    rows = [
        pos_ln1_w, pos_ln1_b,
        time_ln1_w, time_ln1_b, time_lin_b, time_ln2_w, time_ln2_b,
        temp_b1, act_b1,
        temp_w2[:, 0], temp_w2[:, 1], act_w2[:, 0],
        pos_lin_b, pos_ln2_w, pos_ln2_b,
        conf_b1, conf_b2, conf_b3, temp_b2, act_b2,
    ]
    rows += [conf_w1[k] for k in range(CONF_IN)]
    rows += [conf_w2[k] for k in range(CONF_H)]
    rows += [conf_w3[:, 0]]
    rows += [pos_lin_w[:, j] for j in range(4)]        # pos_fc weight, transposed rows
    assert len(rows) == N_P_ROWS
    pslab = jnp.stack([pad_row(r) for r in rows], axis=0)
    pslab = jnp.pad(pslab, ((0, P_PAD_ROWS - N_P_ROWS), (0, 0)))
    return wslab, pslab


# ---------------------------------------------------------------------------
# Wrapper
# ---------------------------------------------------------------------------
@jax.jit
def cgstvg_head(output_2d, output_motion, output_text, wslab, pslab):
    """output_* are (seq, B=1, HIDDEN); returns the module's output dict."""
    feat_2d = output_2d[:, 0, :]        # (T, H)
    feat_mo = output_motion[:, 0, :]    # (T, H)
    feat_tx = output_text[:, 0, :]      # (L, H)

    # Merge features + small params into one (64, 256) f32 slab -> the kernel
    # sees exactly 2 inputs (this slab + the bf16 weight slab): 2 DMAs total.
    slab = jnp.concatenate([feat_2d, feat_mo, feat_tx, pslab], axis=0)
    assert slab.shape == (SLAB_ROWS, HIDDEN)

    vmem = lambda: pl.BlockSpec(memory_space=pltpu.MemorySpace.VMEM)
    packed = pl.pallas_call(
        cgstvg_head_kernel,
        out_shape=jax.ShapeDtypeStruct((T, OUT_LANES), jnp.float32),
        in_specs=[vmem(), vmem()],
        out_specs=vmem(),
    )(slab, wslab)

    return {
        "pred_boxes": packed[:, 0:4],                 # (T, 4)
        "boxes_conf": packed[:, 6],                   # (T,)
        "pred_sted": packed[None, :, 4:6],            # (B=1, T, 2)
        "pred_actioness": packed[None, :, 7:8],       # (B=1, T, 1)
        "aux_outputs": [],                            # NUM_LAYERS == 1
    }


# ---------------------------------------------------------------------------
# Pure-JAX reference (same math, unpacked params, no Pallas). The MXU-path
# weights are quantized to bf16 exactly as the kernel stores them.
# ---------------------------------------------------------------------------
def ref_head(output_2d, output_motion, output_text, *params):
    (pos_ln1_w, pos_ln1_b, pos_lin_w, pos_lin_b, pos_ln2_w, pos_ln2_b,
     time_ln1_w, time_ln1_b, time_lin_w, time_lin_b, time_ln2_w, time_ln2_b,
     conf_w1, conf_b1, conf_w2, conf_b2, conf_w3, conf_b3,
     temp_w1, temp_b1, temp_w2, temp_b2,
     act_w1, act_b1, act_w2, act_b2) = params

    bf = jnp.bfloat16
    hi = jax.lax.Precision.HIGHEST

    feat_2d = output_2d[:, 0, :]
    feat_mo = output_motion[:, 0, :]
    feat_tx = output_text[:, 0, :]
    l_len = feat_tx.shape[0]

    frames_cls = (feat_2d + feat_mo + jnp.sum(feat_tx, 0, keepdims=True)) / (l_len + 2.0)
    videos_cls = jnp.mean(frames_cls, 0, keepdims=True)

    x = _layernorm(frames_cls, pos_ln1_w, pos_ln1_b)
    x = jnp.maximum(jnp.dot(x, pos_lin_w, precision=hi) + pos_lin_b, 0.0)
    pos_query = jax.nn.sigmoid(_layernorm(x, pos_ln2_w, pos_ln2_b))

    y = _layernorm(videos_cls, time_ln1_w, time_ln1_b)
    y = jnp.dot(y.astype(bf), time_lin_w.astype(bf), preferred_element_type=jnp.float32)
    y = jnp.maximum(y + time_lin_b, 0.0)
    content = _layernorm(y, time_ln2_w, time_ln2_b)
    time_query = jnp.broadcast_to(content, (T, HIDDEN))

    c = jnp.maximum(jnp.dot(pos_query, conf_w1, precision=hi) + conf_b1, 0.0)
    c = jnp.maximum(jnp.dot(c, conf_w2, precision=hi) + conf_b2, 0.0)
    conf_query = jax.nn.sigmoid(jnp.dot(c, conf_w3, precision=hi) + conf_b3)[:, 0]

    t = jnp.maximum(
        jnp.dot(time_query.astype(bf), temp_w1.astype(bf),
                preferred_element_type=jnp.float32) + temp_b1, 0.0)
    sted = (jnp.dot(t, temp_w2, precision=hi) + temp_b2)[None]

    a = jnp.maximum(
        jnp.dot(time_query.astype(bf), act_w1.astype(bf),
                preferred_element_type=jnp.float32) + act_b1, 0.0)
    act = (jnp.dot(a, act_w2, precision=hi) + act_b2)[None]

    return {"pred_boxes": pos_query, "boxes_conf": conf_query,
            "pred_sted": sted, "pred_actioness": act}


if __name__ == "__main__":
    key = jax.random.PRNGKey(0)
    k1, k2, k3, kp = jax.random.split(key, 4)

    # Synthetic decoder outputs (seq-first, B=1), standing in for the frozen
    # VJEPA / text-encoder / transformer-decoder pipeline upstream of the head.
    output_2d = jax.random.normal(k1, (T, B, HIDDEN), jnp.float32)
    output_motion = jax.random.normal(k2, (T, B, HIDDEN), jnp.float32)
    output_text = jax.random.normal(k3, (L_TEXT, B, HIDDEN), jnp.float32)

    params = make_params(kp)
    wslab, pslab = pack_params(params)          # one-time packing into 2 slabs

    out = cgstvg_head(output_2d, output_motion, output_text, wslab, pslab)
    jax.block_until_ready(out)

    ref = ref_head(output_2d, output_motion, output_text, *params)
    # 1e-3 tolerance covers MXU accumulation-order differences on the bf16
    # weight path; both sides use identically bf16-quantized weights.
    for name in ("pred_boxes", "boxes_conf", "pred_sted", "pred_actioness"):
        assert out[name].shape == ref[name].shape, name
        assert jnp.allclose(out[name], ref[name], atol=1e-3, rtol=1e-3), name

    print("KERNEL_OK")
</pallas_src>

<mosaic_0001>
module attributes {stable_mosaic.version = 11 : i64} {
  func.func @cgstvg_head_kernel(%arg0: memref<64x256xf32, #tpu.memory_space<vmem>>, %arg1: memref<256x768xbf16, #tpu.memory_space<vmem>>, %arg2: memref<8x128xf32, #tpu.memory_space<vmem>>) attributes {dimension_semantics = [], scalar_prefetch = 0 : i64, scratch_operands = 0 : i64, tpu.core_type = #tpu.core_type<tc>} {
    %c0 = arith.constant 0 : index
    %c0_0 = arith.constant 0 : index
    %0 = vector.load %arg0[%c0, %c0_0] : memref<64x256xf32, #tpu.memory_space<vmem>>, vector<8x256xf32>
    %c8 = arith.constant 8 : index
    %c0_1 = arith.constant 0 : index
    %1 = vector.load %arg0[%c8, %c0_1] : memref<64x256xf32, #tpu.memory_space<vmem>>, vector<8x256xf32>
    %c16 = arith.constant 16 : index
    %c0_2 = arith.constant 0 : index
    %2 = vector.load %arg0[%c16, %c0_2] : memref<64x256xf32, #tpu.memory_space<vmem>>, vector<6x256xf32>
    %cst = arith.constant dense<0.000000e+00> : vector<256xf32>
    %3 = vector.multi_reduction <add>, %2, %cst [0] : vector<6x256xf32> to vector<256xf32>
    %4 = vector.shape_cast %3 : vector<256xf32> to vector<1x256xf32>
    %5 = arith.addf %0, %1 : vector<8x256xf32>
    %6 = vector.broadcast %4 : vector<1x256xf32> to vector<8x256xf32>
    %7 = arith.addf %5, %6 : vector<8x256xf32>
    %cst_3 = arith.constant 8.000000e+00 : f32
    %8 = vector.broadcast %cst_3 : f32 to vector<8x256xf32>
    %9 = arith.divf %7, %8 : vector<8x256xf32>
    %cst_4 = arith.constant dense<0.000000e+00> : vector<256xf32>
    %10 = vector.multi_reduction <add>, %9, %cst_4 [0] : vector<8x256xf32> to vector<256xf32>
    %11 = vector.shape_cast %10 : vector<256xf32> to vector<1x256xf32>
    %cst_5 = arith.constant 8.000000e+00 : f32
    %12 = vector.broadcast %cst_5 : f32 to vector<1x256xf32>
    %13 = arith.divf %11, %12 : vector<1x256xf32>
    %c22 = arith.constant 22 : index
    %c0_6 = arith.constant 0 : index
    %14 = vector.load %arg0[%c22, %c0_6] : memref<64x256xf32, #tpu.memory_space<vmem>>, vector<1x256xf32>
    %c23 = arith.constant 23 : index
    %c0_7 = arith.constant 0 : index
    %15 = vector.load %arg0[%c23, %c0_7] : memref<64x256xf32, #tpu.memory_space<vmem>>, vector<1x256xf32>
    %cst_8 = arith.constant dense<0.000000e+00> : vector<8xf32>
    %16 = vector.multi_reduction <add>, %9, %cst_8 [1] : vector<8x256xf32> to vector<8xf32>
    %17 = vector.shape_cast %16 : vector<8xf32> to vector<8x1xf32>
    %cst_9 = arith.constant 2.560000e+02 : f32
    %18 = vector.broadcast %cst_9 : f32 to vector<8x1xf32>
    %19 = arith.divf %17, %18 : vector<8x1xf32>
    %20 = vector.broadcast %19 : vector<8x1xf32> to vector<8x256xf32>
    %21 = arith.subf %9, %20 : vector<8x256xf32>
    %22 = arith.mulf %21, %21 : vector<8x256xf32>
    %cst_10 = arith.constant dense<0.000000e+00> : vector<8xf32>
    %23 = vector.multi_reduction <add>, %22, %cst_10 [1] : vector<8x256xf32> to vector<8xf32>
    %24 = vector.shape_cast %23 : vector<8xf32> to vector<8x1xf32>
    %cst_11 = arith.constant 2.560000e+02 : f32
    %25 = vector.broadcast %cst_11 : f32 to vector<8x1xf32>
    %26 = arith.divf %24, %25 : vector<8x1xf32>
    %27 = vector.broadcast %19 : vector<8x1xf32> to vector<8x256xf32>
    %28 = arith.subf %9, %27 : vector<8x256xf32>
    %cst_12 = arith.constant 9.99999996E-13 : f32
    %29 = vector.broadcast %cst_12 : f32 to vector<8x1xf32>
    %30 = arith.addf %26, %29 : vector<8x1xf32>
    %31 = math.rsqrt %30 : vector<8x1xf32>
    %32 = vector.broadcast %31 : vector<8x1xf32> to vector<8x256xf32>
    %33 = arith.mulf %28, %32 : vector<8x256xf32>
    %34 = vector.broadcast %14 : vector<1x256xf32> to vector<8x256xf32>
    %35 = arith.mulf %33, %34 : vector<8x256xf32>
    %36 = vector.broadcast %15 : vector<1x256xf32> to vector<8x256xf32>
    %37 = arith.addf %35, %36 : vector<8x256xf32>
    %c55 = arith.constant 55 : index
    %c0_13 = arith.constant 0 : index
    %38 = vector.load %arg0[%c55, %c0_13] : memref<64x256xf32, #tpu.memory_space<vmem>>, vector<1x256xf32>
    %39 = vector.broadcast %38 : vector<1x256xf32> to vector<8x256xf32>
    %40 = arith.mulf %37, %39 : vector<8x256xf32>
    %cst_14 = arith.constant dense<0.000000e+00> : vector<8xf32>
    %41 = vector.multi_reduction <add>, %40, %cst_14 [1] : vector<8x256xf32> to vector<8xf32>
    %42 = vector.shape_cast %41 : vector<8xf32> to vector<8x1xf32>
    %c56 = arith.constant 56 : index
    %c0_15 = arith.constant 0 : index
    %43 = vector.load %arg0[%c56, %c0_15] : memref<64x256xf32, #tpu.memory_space<vmem>>, vector<1x256xf32>
    %44 = vector.broadcast %43 : vector<1x256xf32> to vector<8x256xf32>
    %45 = arith.mulf %37, %44 : vector<8x256xf32>
    %cst_16 = arith.constant dense<0.000000e+00> : vector<8xf32>
    %46 = vector.multi_reduction <add>, %45, %cst_16 [1] : vector<8x256xf32> to vector<8xf32>
    %47 = vector.shape_cast %46 : vector<8xf32> to vector<8x1xf32>
    %c57 = arith.constant 57 : index
    %c0_17 = arith.constant 0 : index
    %48 = vector.load %arg0[%c57, %c0_17] : memref<64x256xf32, #tpu.memory_space<vmem>>, vector<1x256xf32>
    %49 = vector.broadcast %48 : vector<1x256xf32> to vector<8x256xf32>
    %50 = arith.mulf %37, %49 : vector<8x256xf32>
    %cst_18 = arith.constant dense<0.000000e+00> : vector<8xf32>
    %51 = vector.multi_reduction <add>, %50, %cst_18 [1] : vector<8x256xf32> to vector<8xf32>
    %52 = vector.shape_cast %51 : vector<8xf32> to vector<8x1xf32>
    %c58 = arith.constant 58 : index
    %c0_19 = arith.constant 0 : index
    %53 = vector.load %arg0[%c58, %c0_19] : memref<64x256xf32, #tpu.memory_space<vmem>>, vector<1x256xf32>
    %54 = vector.broadcast %53 : vector<1x256xf32> to vector<8x256xf32>
    %55 = arith.mulf %37, %54 : vector<8x256xf32>
    %cst_20 = arith.constant dense<0.000000e+00> : vector<8xf32>
    %56 = vector.multi_reduction <add>, %55, %cst_20 [1] : vector<8x256xf32> to vector<8xf32>
    %57 = vector.shape_cast %56 : vector<8xf32> to vector<8x1xf32>
    %58 = tpu.concatenate %42, %47, %52, %57 in 1 : vector<8x1xf32>, vector<8x1xf32>, vector<8x1xf32>, vector<8x1xf32> -> vector<8x4xf32>
    %c34 = arith.constant 34 : index
    %c0_21 = arith.constant 0 : index
    %59 = vector.load %arg0[%c34, %c0_21] : memref<64x256xf32, #tpu.memory_space<vmem>>, vector<1x4xf32>
    %60 = vector.broadcast %59 : vector<1x4xf32> to vector<8x4xf32>
    %61 = arith.addf %58, %60 : vector<8x4xf32>
    %cst_22 = arith.constant 0.000000e+00 : f32
    %62 = vector.broadcast %cst_22 : f32 to vector<8x4xf32>
    %63 = arith.maximumf %61, %62 : vector<8x4xf32>
    %c35 = arith.constant 35 : index
    %c0_23 = arith.constant 0 : index
    %64 = vector.load %arg0[%c35, %c0_23] : memref<64x256xf32, #tpu.memory_space<vmem>>, vector<1x4xf32>
    %c36 = arith.constant 36 : index
    %c0_24 = arith.constant 0 : index
    %65 = vector.load %arg0[%c36, %c0_24] : memref<64x256xf32, #tpu.memory_space<vmem>>, vector<1x4xf32>
    %cst_25 = arith.constant dense<0.000000e+00> : vector<8xf32>
    %66 = vector.multi_reduction <add>, %63, %cst_25 [1] : vector<8x4xf32> to vector<8xf32>
    %67 = vector.shape_cast %66 : vector<8xf32> to vector<8x1xf32>
    %cst_26 = arith.constant 4.000000e+00 : f32
    %68 = vector.broadcast %cst_26 : f32 to vector<8x1xf32>
    %69 = arith.divf %67, %68 : vector<8x1xf32>
    %70 = vector.broadcast %69 : vector<8x1xf32> to vector<8x4xf32>
    %71 = arith.subf %63, %70 : vector<8x4xf32>
    %72 = arith.mulf %71, %71 : vector<8x4xf32>
    %cst_27 = arith.constant dense<0.000000e+00> : vector<8xf32>
    %73 = vector.multi_reduction <add>, %72, %cst_27 [1] : vector<8x4xf32> to vector<8xf32>
    %74 = vector.shape_cast %73 : vector<8xf32> to vector<8x1xf32>
    %cst_28 = arith.constant 4.000000e+00 : f32
    %75 = vector.broadcast %cst_28 : f32 to vector<8x1xf32>
    %76 = arith.divf %74, %75 : vector<8x1xf32>
    %77 = vector.broadcast %69 : vector<8x1xf32> to vector<8x4xf32>
    %78 = arith.subf %63, %77 : vector<8x4xf32>
    %cst_29 = arith.constant 9.99999996E-13 : f32
    %79 = vector.broadcast %cst_29 : f32 to vector<8x1xf32>
    %80 = arith.addf %76, %79 : vector<8x1xf32>
    %81 = math.rsqrt %80 : vector<8x1xf32>
    %82 = vector.broadcast %81 : vector<8x1xf32> to vector<8x4xf32>
    %83 = arith.mulf %78, %82 : vector<8x4xf32>
    %84 = vector.broadcast %64 : vector<1x4xf32> to vector<8x4xf32>
    %85 = arith.mulf %83, %84 : vector<8x4xf32>
    %86 = vector.broadcast %65 : vector<1x4xf32> to vector<8x4xf32>
    %87 = arith.addf %85, %86 : vector<8x4xf32>
    %88 = arith.negf %87 : vector<8x4xf32>
    %89 = math.exp %88 : vector<8x4xf32>
    %cst_30 = arith.constant 1.000000e+00 : f32
    %90 = vector.broadcast %cst_30 : f32 to vector<8x4xf32>
    %91 = arith.addf %90, %89 : vector<8x4xf32>
    %92 = arith.divf %90, %91 : vector<8x4xf32>
    %c24 = arith.constant 24 : index
    %c0_31 = arith.constant 0 : index
    %93 = vector.load %arg0[%c24, %c0_31] : memref<64x256xf32, #tpu.memory_space<vmem>>, vector<1x256xf32>
    %c25 = arith.constant 25 : index
    %c0_32 = arith.constant 0 : index
    %94 = vector.load %arg0[%c25, %c0_32] : memref<64x256xf32, #tpu.memory_space<vmem>>, vector<1x256xf32>
    %cst_33 = arith.constant dense<0.000000e+00> : vector<1xf32>
    %95 = vector.multi_reduction <add>, %13, %cst_33 [1] : vector<1x256xf32> to vector<1xf32>
    %96 = vector.shape_cast %95 : vector<1xf32> to vector<1x1xf32>
    %cst_34 = arith.constant 2.560000e+02 : f32
    %97 = vector.broadcast %cst_34 : f32 to vector<1x1xf32>
    %98 = arith.divf %96, %97 : vector<1x1xf32>
    %99 = vector.broadcast %98 : vector<1x1xf32> to vector<1x256xf32>
    %100 = arith.subf %13, %99 : vector<1x256xf32>
    %101 = arith.mulf %100, %100 : vector<1x256xf32>
    %cst_35 = arith.constant dense<0.000000e+00> : vector<1xf32>
    %102 = vector.multi_reduction <add>, %101, %cst_35 [1] : vector<1x256xf32> to vector<1xf32>
    %103 = vector.shape_cast %102 : vector<1xf32> to vector<1x1xf32>
    %cst_36 = arith.constant 2.560000e+02 : f32
    %104 = vector.broadcast %cst_36 : f32 to vector<1x1xf32>
    %105 = arith.divf %103, %104 : vector<1x1xf32>
    %106 = vector.broadcast %98 : vector<1x1xf32> to vector<1x256xf32>
    %107 = arith.subf %13, %106 : vector<1x256xf32>
    %cst_37 = arith.constant 9.99999996E-13 : f32
    %108 = vector.broadcast %cst_37 : f32 to vector<1x1xf32>
    %109 = arith.addf %105, %108 : vector<1x1xf32>
    %110 = math.rsqrt %109 : vector<1x1xf32>
    %111 = vector.broadcast %110 : vector<1x1xf32> to vector<1x256xf32>
    %112 = arith.mulf %107, %111 : vector<1x256xf32>
    %113 = arith.mulf %112, %93 : vector<1x256xf32>
    %114 = arith.addf %113, %94 : vector<1x256xf32>
    %115 = arith.truncf %114 : vector<1x256xf32> to vector<1x256xbf16>
    %c0_38 = arith.constant 0 : index
    %c0_39 = arith.constant 0 : index
    %116 = vector.load %arg1[%c0_38, %c0_39] : memref<256x768xbf16, #tpu.memory_space<vmem>>, vector<256x256xbf16>
    %cst_40 = arith.constant dense<0.000000e+00> : vector<1x256xf32>
    %117 = tpu.matmul %115, %116, %cst_40 {dimension_numbers = #tpu.dot_dimension_numbers<[1], [0], [0], [1], [0, 0, 1, 1], [], []>} : vector<1x256xbf16>, vector<256x256xbf16>, vector<1x256xf32> -> vector<1x256xf32>
    %c26 = arith.constant 26 : index
    %c0_41 = arith.constant 0 : index
    %118 = vector.load %arg0[%c26, %c0_41] : memref<64x256xf32, #tpu.memory_space<vmem>>, vector<1x256xf32>
    %119 = arith.addf %117, %118 : vector<1x256xf32>
    %cst_42 = arith.constant 0.000000e+00 : f32
    %120 = vector.broadcast %cst_42 : f32 to vector<1x256xf32>
    %121 = arith.maximumf %119, %120 : vector<1x256xf32>
    %c27 = arith.constant 27 : index
    %c0_43 = arith.constant 0 : index
    %122 = vector.load %arg0[%c27, %c0_43] : memref<64x256xf32, #tpu.memory_space<vmem>>, vector<1x256xf32>
    %c28 = arith.constant 28 : index
    %c0_44 = arith.constant 0 : index
    %123 = vector.load %arg0[%c28, %c0_44] : memref<64x256xf32, #tpu.memory_space<vmem>>, vector<1x256xf32>
    %cst_45 = arith.constant dense<0.000000e+00> : vector<1xf32>
    %124 = vector.multi_reduction <add>, %121, %cst_45 [1] : vector<1x256xf32> to vector<1xf32>
    %125 = vector.shape_cast %124 : vector<1xf32> to vector<1x1xf32>
    %cst_46 = arith.constant 2.560000e+02 : f32
    %126 = vector.broadcast %cst_46 : f32 to vector<1x1xf32>
    %127 = arith.divf %125, %126 : vector<1x1xf32>
    %128 = vector.broadcast %127 : vector<1x1xf32> to vector<1x256xf32>
    %129 = arith.subf %121, %128 : vector<1x256xf32>
    %130 = arith.mulf %129, %129 : vector<1x256xf32>
    %cst_47 = arith.constant dense<0.000000e+00> : vector<1xf32>
    %131 = vector.multi_reduction <add>, %130, %cst_47 [1] : vector<1x256xf32> to vector<1xf32>
    %132 = vector.shape_cast %131 : vector<1xf32> to vector<1x1xf32>
    %cst_48 = arith.constant 2.560000e+02 : f32
    %133 = vector.broadcast %cst_48 : f32 to vector<1x1xf32>
    %134 = arith.divf %132, %133 : vector<1x1xf32>
    %135 = vector.broadcast %127 : vector<1x1xf32> to vector<1x256xf32>
    %136 = arith.subf %121, %135 : vector<1x256xf32>
    %cst_49 = arith.constant 9.99999996E-13 : f32
    %137 = vector.broadcast %cst_49 : f32 to vector<1x1xf32>
    %138 = arith.addf %134, %137 : vector<1x1xf32>
    %139 = math.rsqrt %138 : vector<1x1xf32>
    %140 = vector.broadcast %139 : vector<1x1xf32> to vector<1x256xf32>
    %141 = arith.mulf %136, %140 : vector<1x256xf32>
    %142 = arith.mulf %141, %122 : vector<1x256xf32>
    %143 = arith.addf %142, %123 : vector<1x256xf32>
    %c29 = arith.constant 29 : index
    %c0_50 = arith.constant 0 : index
    %144 = vector.load %arg0[%c29, %c0_50] : memref<64x256xf32, #tpu.memory_space<vmem>>, vector<1x256xf32>
    %c30 = arith.constant 30 : index
    %c0_51 = arith.constant 0 : index
    %145 = vector.load %arg0[%c30, %c0_51] : memref<64x256xf32, #tpu.memory_space<vmem>>, vector<1x256xf32>
    %146 = tpu.concatenate %144, %145 in 1 : vector<1x256xf32>, vector<1x256xf32> -> vector<1x512xf32>
    %147 = arith.truncf %143 : vector<1x256xf32> to vector<1x256xbf16>
    %c0_52 = arith.constant 0 : index
    %c256 = arith.constant 256 : index
    %148 = vector.load %arg1[%c0_52, %c256] : memref<256x768xbf16, #tpu.memory_space<vmem>>, vector<256x512xbf16>
    %cst_53 = arith.constant dense<0.000000e+00> : vector<1x512xf32>
    %149 = tpu.matmul %147, %148, %cst_53 {dimension_numbers = #tpu.dot_dimension_numbers<[1], [0], [0], [1], [0, 0, 1, 1], [], []>} : vector<1x256xbf16>, vector<256x512xbf16>, vector<1x512xf32> -> vector<1x512xf32>
    %150 = arith.addf %149, %146 : vector<1x512xf32>
    %cst_54 = arith.constant 0.000000e+00 : f32
    %151 = vector.broadcast %cst_54 : f32 to vector<1x512xf32>
    %152 = arith.maximumf %150, %151 : vector<1x512xf32>
    %153 = vector.extract_strided_slice %152 {offsets = [0, 0], sizes = [1, 256], strides = [1, 1]} : vector<1x512xf32> to vector<1x256xf32>
    %154 = vector.extract_strided_slice %152 {offsets = [0, 256], sizes = [1, 256], strides = [1, 1]} : vector<1x512xf32> to vector<1x256xf32>
    %c31 = arith.constant 31 : index
    %c0_55 = arith.constant 0 : index
    %155 = vector.load %arg0[%c31, %c0_55] : memref<64x256xf32, #tpu.memory_space<vmem>>, vector<1x256xf32>
    %156 = arith.mulf %153, %155 : vector<1x256xf32>
    %cst_56 = arith.constant dense<0.000000e+00> : vector<1xf32>
    %157 = vector.multi_reduction <add>, %156, %cst_56 [1] : vector<1x256xf32> to vector<1xf32>
    %158 = vector.shape_cast %157 : vector<1xf32> to vector<1x1xf32>
    %c40 = arith.constant 40 : index
    %c0_57 = arith.constant 0 : index
    %159 = vector.load %arg0[%c40, %c0_57] : memref<64x256xf32, #tpu.memory_space<vmem>>, vector<1x1xf32>
    %160 = arith.addf %158, %159 : vector<1x1xf32>
    %c32 = arith.constant 32 : index
    %c0_58 = arith.constant 0 : index
    %161 = vector.load %arg0[%c32, %c0_58] : memref<64x256xf32, #tpu.memory_space<vmem>>, vector<1x256xf32>
    %162 = arith.mulf %153, %161 : vector<1x256xf32>
    %cst_59 = arith.constant dense<0.000000e+00> : vector<1xf32>
    %163 = vector.multi_reduction <add>, %162, %cst_59 [1] : vector<1x256xf32> to vector<1xf32>
    %164 = vector.shape_cast %163 : vector<1xf32> to vector<1x1xf32>
    %c40_60 = arith.constant 40 : index
    %c1 = arith.constant 1 : index
    %165 = vector.load %arg0[%c40_60, %c1] : memref<64x256xf32, #tpu.memory_space<vmem>>, vector<1x1xf32>
    %166 = arith.addf %164, %165 : vector<1x1xf32>
    %c33 = arith.constant 33 : index
    %c0_61 = arith.constant 0 : index
    %167 = vector.load %arg0[%c33, %c0_61] : memref<64x256xf32, #tpu.memory_space<vmem>>, vector<1x256xf32>
    %168 = arith.mulf %154, %167 : vector<1x256xf32>
    %cst_62 = arith.constant dense<0.000000e+00> : vector<1xf32>
    %169 = vector.multi_reduction <add>, %168, %cst_62 [1] : vector<1x256xf32> to vector<1xf32>
    %170 = vector.shape_cast %169 : vector<1xf32> to vector<1x1xf32>
    %c41 = arith.constant 41 : index
    %c0_63 = arith.constant 0 : index
    %171 = vector.load %arg0[%c41, %c0_63] : memref<64x256xf32, #tpu.memory_space<vmem>>, vector<1x1xf32>
    %172 = arith.addf %170, %171 : vector<1x1xf32>
    %173 = tpu.concatenate %160, %166 in 1 : vector<1x1xf32>, vector<1x1xf32> -> vector<1x2xf32>
    %174 = vector.shape_cast %173 : vector<1x2xf32> to vector<1x2xf32>
    %175 = vector.broadcast %174 : vector<1x2xf32> to vector<8x2xf32>
    %176 = vector.shape_cast %172 : vector<1x1xf32> to vector<1x1xf32>
    %177 = vector.broadcast %176 : vector<1x1xf32> to vector<8x1xf32>
    %c37 = arith.constant 37 : index
    %c0_64 = arith.constant 0 : index
    %178 = vector.load %arg0[%c37, %c0_64] : memref<64x256xf32, #tpu.memory_space<vmem>>, vector<1x8xf32>
    %179 = vector.extract_strided_slice %92 {offsets = [0, 0], sizes = [8, 1], strides = [1, 1]} : vector<8x4xf32> to vector<8x1xf32>
    %c42 = arith.constant 42 : index
    %c0_65 = arith.constant 0 : index
    %180 = vector.load %arg0[%c42, %c0_65] : memref<64x256xf32, #tpu.memory_space<vmem>>, vector<1x8xf32>
    %181 = vector.broadcast %179 : vector<8x1xf32> to vector<8x8xf32>
    %182 = vector.broadcast %180 : vector<1x8xf32> to vector<8x8xf32>
    %183 = arith.mulf %181, %182 : vector<8x8xf32>
    %184 = vector.broadcast %178 : vector<1x8xf32> to vector<8x8xf32>
    %185 = arith.addf %184, %183 : vector<8x8xf32>
    %186 = vector.extract_strided_slice %92 {offsets = [0, 1], sizes = [8, 1], strides = [1, 1]} : vector<8x4xf32> to vector<8x1xf32>
    %c43 = arith.constant 43 : index
    %c0_66 = arith.constant 0 : index
    %187 = vector.load %arg0[%c43, %c0_66] : memref<64x256xf32, #tpu.memory_space<vmem>>, vector<1x8xf32>
    %188 = vector.broadcast %186 : vector<8x1xf32> to vector<8x8xf32>
    %189 = vector.broadcast %187 : vector<1x8xf32> to vector<8x8xf32>
    %190 = arith.mulf %188, %189 : vector<8x8xf32>
    %191 = arith.addf %185, %190 : vector<8x8xf32>
    %192 = vector.extract_strided_slice %92 {offsets = [0, 2], sizes = [8, 1], strides = [1, 1]} : vector<8x4xf32> to vector<8x1xf32>
    %c44 = arith.constant 44 : index
    %c0_67 = arith.constant 0 : index
    %193 = vector.load %arg0[%c44, %c0_67] : memref<64x256xf32, #tpu.memory_space<vmem>>, vector<1x8xf32>
    %194 = vector.broadcast %192 : vector<8x1xf32> to vector<8x8xf32>
    %195 = vector.broadcast %193 : vector<1x8xf32> to vector<8x8xf32>
    %196 = arith.mulf %194, %195 : vector<8x8xf32>
    %197 = arith.addf %191, %196 : vector<8x8xf32>
    %198 = vector.extract_strided_slice %92 {offsets = [0, 3], sizes = [8, 1], strides = [1, 1]} : vector<8x4xf32> to vector<8x1xf32>
    %c45 = arith.constant 45 : index
    %c0_68 = arith.constant 0 : index
    %199 = vector.load %arg0[%c45, %c0_68] : memref<64x256xf32, #tpu.memory_space<vmem>>, vector<1x8xf32>
    %200 = vector.broadcast %198 : vector<8x1xf32> to vector<8x8xf32>
    %201 = vector.broadcast %199 : vector<1x8xf32> to vector<8x8xf32>
    %202 = arith.mulf %200, %201 : vector<8x8xf32>
    %203 = arith.addf %197, %202 : vector<8x8xf32>
    %cst_69 = arith.constant 0.000000e+00 : f32
    %204 = vector.broadcast %cst_69 : f32 to vector<8x8xf32>
    %205 = arith.maximumf %203, %204 : vector<8x8xf32>
    %c38 = arith.constant 38 : index
    %c0_70 = arith.constant 0 : index
    %206 = vector.load %arg0[%c38, %c0_70] : memref<64x256xf32, #tpu.memory_space<vmem>>, vector<1x8xf32>
    %207 = vector.extract_strided_slice %205 {offsets = [0, 0], sizes = [8, 1], strides = [1, 1]} : vector<8x8xf32> to vector<8x1xf32>
    %c46 = arith.constant 46 : index
    %c0_71 = arith.constant 0 : index
    %208 = vector.load %arg0[%c46, %c0_71] : memref<64x256xf32, #tpu.memory_space<vmem>>, vector<1x8xf32>
    %209 = vector.broadcast %207 : vector<8x1xf32> to vector<8x8xf32>
    %210 = vector.broadcast %208 : vector<1x8xf32> to vector<8x8xf32>
    %211 = arith.mulf %209, %210 : vector<8x8xf32>
    %212 = vector.broadcast %206 : vector<1x8xf32> to vector<8x8xf32>
    %213 = arith.addf %212, %211 : vector<8x8xf32>
    %214 = vector.extract_strided_slice %205 {offsets = [0, 1], sizes = [8, 1], strides = [1, 1]} : vector<8x8xf32> to vector<8x1xf32>
    %c47 = arith.constant 47 : index
    %c0_72 = arith.constant 0 : index
    %215 = vector.load %arg0[%c47, %c0_72] : memref<64x256xf32, #tpu.memory_space<vmem>>, vector<1x8xf32>
    %216 = vector.broadcast %214 : vector<8x1xf32> to vector<8x8xf32>
    %217 = vector.broadcast %215 : vector<1x8xf32> to vector<8x8xf32>
    %218 = arith.mulf %216, %217 : vector<8x8xf32>
    %219 = arith.addf %213, %218 : vector<8x8xf32>
    %220 = vector.extract_strided_slice %205 {offsets = [0, 2], sizes = [8, 1], strides = [1, 1]} : vector<8x8xf32> to vector<8x1xf32>
    %c48 = arith.constant 48 : index
    %c0_73 = arith.constant 0 : index
    %221 = vector.load %arg0[%c48, %c0_73] : memref<64x256xf32, #tpu.memory_space<vmem>>, vector<1x8xf32>
    %222 = vector.broadcast %220 : vector<8x1xf32> to vector<8x8xf32>
    %223 = vector.broadcast %221 : vector<1x8xf32> to vector<8x8xf32>
    %224 = arith.mulf %222, %223 : vector<8x8xf32>
    %225 = arith.addf %219, %224 : vector<8x8xf32>
    %226 = vector.extract_strided_slice %205 {offsets = [0, 3], sizes = [8, 1], strides = [1, 1]} : vector<8x8xf32> to vector<8x1xf32>
    %c49 = arith.constant 49 : index
    %c0_74 = arith.constant 0 : index
    %227 = vector.load %arg0[%c49, %c0_74] : memref<64x256xf32, #tpu.memory_space<vmem>>, vector<1x8xf32>
    %228 = vector.broadcast %226 : vector<8x1xf32> to vector<8x8xf32>
    %229 = vector.broadcast %227 : vector<1x8xf32> to vector<8x8xf32>
    %230 = arith.mulf %228, %229 : vector<8x8xf32>
    %231 = arith.addf %225, %230 : vector<8x8xf32>
    %232 = vector.extract_strided_slice %205 {offsets = [0, 4], sizes = [8, 1], strides = [1, 1]} : vector<8x8xf32> to vector<8x1xf32>
    %c50 = arith.constant 50 : index
    %c0_75 = arith.constant 0 : index
    %233 = vector.load %arg0[%c50, %c0_75] : memref<64x256xf32, #tpu.memory_space<vmem>>, vector<1x8xf32>
    %234 = vector.broadcast %232 : vector<8x1xf32> to vector<8x8xf32>
    %235 = vector.broadcast %233 : vector<1x8xf32> to vector<8x8xf32>
    %236 = arith.mulf %234, %235 : vector<8x8xf32>
    %237 = arith.addf %231, %236 : vector<8x8xf32>
    %238 = vector.extract_strided_slice %205 {offsets = [0, 5], sizes = [8, 1], strides = [1, 1]} : vector<8x8xf32> to vector<8x1xf32>
    %c51 = arith.constant 51 : index
    %c0_76 = arith.constant 0 : index
    %239 = vector.load %arg0[%c51, %c0_76] : memref<64x256xf32, #tpu.memory_space<vmem>>, vector<1x8xf32>
    %240 = vector.broadcast %238 : vector<8x1xf32> to vector<8x8xf32>
    %241 = vector.broadcast %239 : vector<1x8xf32> to vector<8x8xf32>
    %242 = arith.mulf %240, %241 : vector<8x8xf32>
    %243 = arith.addf %237, %242 : vector<8x8xf32>
    %244 = vector.extract_strided_slice %205 {offsets = [0, 6], sizes = [8, 1], strides = [1, 1]} : vector<8x8xf32> to vector<8x1xf32>
    %c52 = arith.constant 52 : index
    %c0_77 = arith.constant 0 : index
    %245 = vector.load %arg0[%c52, %c0_77] : memref<64x256xf32, #tpu.memory_space<vmem>>, vector<1x8xf32>
    %246 = vector.broadcast %244 : vector<8x1xf32> to vector<8x8xf32>
    %247 = vector.broadcast %245 : vector<1x8xf32> to vector<8x8xf32>
    %248 = arith.mulf %246, %247 : vector<8x8xf32>
    %249 = arith.addf %243, %248 : vector<8x8xf32>
    %250 = vector.extract_strided_slice %205 {offsets = [0, 7], sizes = [8, 1], strides = [1, 1]} : vector<8x8xf32> to vector<8x1xf32>
    %c53 = arith.constant 53 : index
    %c0_78 = arith.constant 0 : index
    %251 = vector.load %arg0[%c53, %c0_78] : memref<64x256xf32, #tpu.memory_space<vmem>>, vector<1x8xf32>
    %252 = vector.broadcast %250 : vector<8x1xf32> to vector<8x8xf32>
    %253 = vector.broadcast %251 : vector<1x8xf32> to vector<8x8xf32>
    %254 = arith.mulf %252, %253 : vector<8x8xf32>
    %255 = arith.addf %249, %254 : vector<8x8xf32>
    %cst_79 = arith.constant 0.000000e+00 : f32
    %256 = vector.broadcast %cst_79 : f32 to vector<8x8xf32>
    %257 = arith.maximumf %255, %256 : vector<8x8xf32>
    %c54 = arith.constant 54 : index
    %c0_80 = arith.constant 0 : index
    %258 = vector.load %arg0[%c54, %c0_80] : memref<64x256xf32, #tpu.memory_space<vmem>>, vector<1x8xf32>
    %259 = vector.broadcast %258 : vector<1x8xf32> to vector<8x8xf32>
    %260 = arith.mulf %257, %259 : vector<8x8xf32>
    %cst_81 = arith.constant dense<0.000000e+00> : vector<8xf32>
    %261 = vector.multi_reduction <add>, %260, %cst_81 [1] : vector<8x8xf32> to vector<8xf32>
    %262 = vector.shape_cast %261 : vector<8xf32> to vector<8x1xf32>
    %c39 = arith.constant 39 : index
    %c0_82 = arith.constant 0 : index
    %263 = vector.load %arg0[%c39, %c0_82] : memref<64x256xf32, #tpu.memory_space<vmem>>, vector<1x1xf32>
    %264 = vector.broadcast %263 : vector<1x1xf32> to vector<8x1xf32>
    %265 = arith.addf %262, %264 : vector<8x1xf32>
    %266 = arith.negf %265 : vector<8x1xf32>
    %267 = math.exp %266 : vector<8x1xf32>
    %cst_83 = arith.constant 1.000000e+00 : f32
    %268 = vector.broadcast %cst_83 : f32 to vector<8x1xf32>
    %269 = arith.addf %268, %267 : vector<8x1xf32>
    %270 = arith.divf %268, %269 : vector<8x1xf32>
    %cst_84 = arith.constant 0.000000e+00 : f32
    %271 = vector.broadcast %cst_84 : f32 to vector<8x120xf32>
    %272 = tpu.concatenate %92, %175, %270, %177, %271 in 1 : vector<8x4xf32>, vector<8x2xf32>, vector<8x1xf32>, vector<8x1xf32>, vector<8x120xf32> -> vector<8x128xf32>
    %c0_85 = arith.constant 0 : index
    %c0_86 = arith.constant 0 : index
    %273 = vector.load %arg2[%c0_85, %c0_86] : memref<8x128xf32, #tpu.memory_space<vmem>>, vector<8x128xf32>
    tpu.vector_store %arg2[%c0_85, %c0_86], %272 {strides = array<i32>} : memref<8x128xf32, #tpu.memory_space<vmem>>, vector<8x128xf32>,
    return
  }
}

</mosaic_0001>

<llo_original>
// kernel: cgstvg_head.1
$region0: #{cgstvg_head.1}
  #allocation0 [shape = 'u32[]', space=smem, size = 0x4, offset = 0x4, fixed_abs, tag = 'smem constant byte address 0x4 - core index']
  #allocation1 [shape = 'u32[144,128]{1,0:T(1,128)}', space=vmem, size = 0x12000, scoped, tag = 'internal scratch']
  %s0 = inlined_call_operand.vmem [shape: f32[64,256], index: 0, kind: input, shape index: {}]
  %s1 = inlined_call_operand.hbm [shape: bf16[256,768], index: 1, kind: input, shape index: {}]
  %s2 = inlined_call_operand.vmem [shape: f32[8,128], index: 2, kind: output, shape index: {}]
  %s3 = sld [smem:[#allocation0]]
  $region22: #{cgstvg_head.1} parent=0
    _
  %s5 = ssub.s32 1, %s3
  %s6 = scalar_select 0, %s5, %s3
  $region1: #{cgstvg_head.1} parent=0
    #allocation2 [shape = 'u8[393216]{0}', space=vmem, size = 0x60000, scoped, tag = 'input window, operand 1, single buffered']
    #allocation3 [shape = 's32[1]{0}', space=sflag, size = 0x4, scoped, tag = 'scoped memory for cgstvg_head.1']
    %7 = vsyncpa [#allocation3], 0
    // Predicated region
    $region2: #{cgstvg_head.1} parent=1 // pred_check
      _
    $region3: #{cgstvg_head.1} parent=1 // pred_check_branch
      %9 = sbr.rel (0) target = $region5
    $region4: #{cgstvg_head.1} parent=1 // pred_region
      _
    $region5: #{cgstvg_head.1} parent=1 // pred_fallthru
      _
    // Predicated region
    $region6: #{cgstvg_head.1} parent=1 // pred_check
      _
    $region7: #{cgstvg_head.1} parent=1 // pred_check_branch
      %11 = sbr.rel (0) target = $region9
    $region8: #{cgstvg_head.1} parent=1 // pred_region
      %s13 = ssub.s32 12288, 12288
      %14 = vsyncadd [#allocation3], %s13
      %s15 = sshll.u32 [#allocation2], 4
      %s16 = int_to_ptr.vmem [resolvable:$true] %s15
      %21 = dma.hbm_to_vmem [thread:$0]  %s1, 12288, %s16, [#allocation3], 384, 384, 24
    $region9: #{cgstvg_head.1} parent=1 // pred_fallthru
      _
    // Predicated region
    $region10: #{cgstvg_head.1} parent=1 // pred_check
      _
    $region11: #{cgstvg_head.1} parent=1 // pred_check_branch
      %23 = sbr.rel (0) target = $region13
    $region12: #{cgstvg_head.1} parent=1 // pred_region
      %24 = dma.done [#allocation3], 12288
    $region13: #{cgstvg_head.1} parent=1 // pred_fallthru
      _
    %v25 = vld [vmem:[%s0] sm:$0xff]
    %v26 = vld [vmem:[%s0 + $0x8] sm:$0xff]
    %v27 = vld [vmem:[%s0 + $0x10] sm:$0xff]
    %v28 = vld [vmem:[%s0 + $0x18] sm:$0xff]
    %v29 = vld [vmem:[%s0 + $0x20] sm:$0x3f]
    %v30 = vld [vmem:[%s0 + $0x28] sm:$0x3f]
    %vm31 = vcmask 1045504
    %v32 = vsel %vm31, %v29, 0.0
    %v33 = vrot.slane %v32, 4
    %v34 = vadd.f32 %v32, %v33
    %v35 = vrot.slane %v34, 2
    %v36 = vadd.f32 %v34, %v35
    %v37 = vrot.slane %v36, 1
    %v38 = vadd.f32 %v36, %v37
    %v39 = vsel %vm31, %v30, 0.0
    %v40 = vrot.slane %v39, 4
    %v41 = vadd.f32 %v39, %v40
    %v42 = vrot.slane %v41, 2
    %v43 = vadd.f32 %v41, %v42
    %v44 = vrot.slane %v43, 1
    %v45 = vadd.f32 %v43, %v44
    %v46 = vadd.f32 %v25, %v27
    %v47 = vadd.f32 %v26, %v28
    %v48 = vadd.f32 %v46, %v38
    %v49 = vadd.f32 %v47, %v45
    %v50 = vrcp.pop 8.0
    %v51 = vmul.f32 %v48, %v50
    %v52 = vmul.f32 %v49, %v50
    %v53 = vrot.slane %v51, 4
    %v54 = vadd.f32 %v51, %v53
    %v55 = vrot.slane %v54, 2
    %v56 = vadd.f32 %v54, %v55
    %v57 = vrot.slane %v56, 1
    %v58 = vadd.f32 %v56, %v57
    %v59 = vrot.slane %v52, 4
    %v60 = vadd.f32 %v52, %v59
    %v61 = vrot.slane %v60, 2
    %v62 = vadd.f32 %v60, %v61
    %v63 = vrot.slane %v62, 1
    %v64 = vadd.f32 %v62, %v63
    %v65 = vmul.f32 %v58, %v50
    %v66 = vmul.f32 %v64, %v50
    %s67 = scalar_lea.vmem %s0, 38
    %v68 = vld [vmem:[%s67] ss:$8 sm:$0x3]
    %s69 = scalar_lea.vmem %s0, 39
    %v70 = vld [vmem:[%s69] ss:$8 sm:$0x3]
    %v71 = vadd.f32 %v51, %v52
    %72 = vadd.xlane.f32.xlu0 %v71
    %v73 = vpop.xlane.xlu0 %72
    %v74 = vrcp.pop 256.0
    %v75 = vmul.f32 %v73, %v74
    %v76 = vsub.f32 %v51, %v75
    %v77 = vsub.f32 %v52, %v75
    %v78 = vmul.f32 %v76, %v76
    %v79 = vmul.f32 %v77, %v77
    %v80 = vadd.f32 %v78, %v79
    %81 = vadd.xlane.f32.xlu0 %v80
    %v82 = vpop.xlane.xlu0 %81
    %v83 = vmul.f32 %v82, %v74
    %v84 = vadd.f32 %v83, 1e-12
    %v85 = vrsqrt.pop %v84
    %v86 = vmul.f32 %v76, %v85
    %v87 = vmul.f32 %v77, %v85
    %v89 = vlaneseq
    %v90 = vshrl.u32 %v89, 7
    %v91 = vsub.s32 0, %v90
    %v92 = vrot.slane %v68, %v91
    %v93 = vlaneseq
    %v94 = vshrl.u32 %v93, 7
    %v95 = vsub.s32 1, %v94
    %v96 = vrot.slane %v68, %v95
    %v99 = vmul.f32 %v86, %v92
    %v100 = vmul.f32 %v87, %v96
    %v102 = vlaneseq
    %v103 = vshrl.u32 %v102, 7
    %v104 = vsub.s32 0, %v103
    %v105 = vrot.slane %v70, %v104
    %v106 = vlaneseq
    %v107 = vshrl.u32 %v106, 7
    %v108 = vsub.s32 1, %v107
    %v109 = vrot.slane %v70, %v108
    %v112 = vadd.f32 %v99, %v105
    %v113 = vadd.f32 %v100, %v109
    %s114 = scalar_lea.vmem %s0, 103
    %v115 = vld [vmem:[%s114] ss:$8 sm:$0x3]
    %v117 = vlaneseq
    %v118 = vshrl.u32 %v117, 7
    %v119 = vsub.s32 0, %v118
    %v120 = vrot.slane %v115, %v119
    %v121 = vlaneseq
    %v122 = vshrl.u32 %v121, 7
    %v123 = vsub.s32 1, %v122
    %v124 = vrot.slane %v115, %v123
    %v127 = vmul.f32 %v112, %v120
    %v128 = vmul.f32 %v113, %v124
    %v129 = vadd.f32 %v127, %v128
    %130 = vadd.xlane.f32.xlu0 %v129
    %v131 = vpop.xlane.xlu0 %130
    %s132 = scalar_lea.vmem %s0, 112
    %v133 = vld [vmem:[%s132] ss:$8 sm:$0x3]
    %v135 = vlaneseq
    %v136 = vshrl.u32 %v135, 7
    %v137 = vsub.s32 0, %v136
    %v138 = vrot.slane %v133, %v137
    %v139 = vlaneseq
    %v140 = vshrl.u32 %v139, 7
    %v141 = vsub.s32 1, %v140
    %v142 = vrot.slane %v133, %v141
    %v145 = vmul.f32 %v112, %v138
    %v146 = vmul.f32 %v113, %v142
    %v147 = vadd.f32 %v145, %v146
    %148 = vadd.xlane.f32.xlu0 %v147
    %v149 = vpop.xlane.xlu0 %148
    %s150 = scalar_lea.vmem %s0, 113
    %v151 = vld [vmem:[%s150] ss:$8 sm:$0x3]
    %v153 = vlaneseq
    %v154 = vshrl.u32 %v153, 7
    %v155 = vsub.s32 0, %v154
    %v156 = vrot.slane %v151, %v155
    %v157 = vlaneseq
    %v158 = vshrl.u32 %v157, 7
    %v159 = vsub.s32 1, %v158
    %v160 = vrot.slane %v151, %v159
    %v163 = vmul.f32 %v112, %v156
    %v164 = vmul.f32 %v113, %v160
    %v165 = vadd.f32 %v163, %v164
    %166 = vadd.xlane.f32.xlu0 %v165
    %v167 = vpop.xlane.xlu0 %166
    %s168 = scalar_lea.vmem %s0, 114
    %v169 = vld [vmem:[%s168] ss:$8 sm:$0x3]
    %v171 = vlaneseq
    %v172 = vshrl.u32 %v171, 7
    %v173 = vsub.s32 0, %v172
    %v174 = vrot.slane %v169, %v173
    %v175 = vlaneseq
    %v176 = vshrl.u32 %v175, 7
    %v177 = vsub.s32 1, %v176
    %v178 = vrot.slane %v169, %v177
    %v181 = vmul.f32 %v112, %v174
    %v182 = vmul.f32 %v113, %v178
    %v183 = vadd.f32 %v181, %v182
    %184 = vadd.xlane.f32.xlu0 %v183
    %v185 = vpop.xlane.xlu0 %184
    %vm186 = vcmask 7168
    %v187 = vsel %vm186, %v131, %v149
    %vm188 = vcmask 15360
    %v189 = vsel %vm188, %v187, %v167
    %vm190 = vcmask 23552
    %v191 = vsel %vm190, %v189, %v185
    %v192 = vld [vmem:[%s0 + $0x42] ss:$0 sm:$0xff]
    %v193 = vadd.f32 %v191, %v192
    %v194 = vmax.f32 %v193, 0.0
    %v195 = vld [vmem:[%s0 + $0x43] ss:$0 sm:$0xff]
    %v196 = vld [vmem:[%s0 + $0x44] ss:$0 sm:$0xff]
    %vm197 = vcmask 31744
    %v198 = vsel %vm197, %v194, 0.0
    %199 = vadd.xlane.f32.xlu0 %v198
    %v200 = vpop.xlane.xlu0 %199
    %v201 = vrcp.pop 4.0
    %v202 = vmul.f32 %v200, %v201
    %v203 = vsub.f32 %v194, %v202
    %v204 = vmul.f32 %v203, %v203
    %v205 = vsel %vm197, %v204, 0.0
    %206 = vadd.xlane.f32.xlu0 %v205
    %v207 = vpop.xlane.xlu0 %206
    %v208 = vmul.f32 %v207, %v201
    %v209 = vadd.f32 %v208, 1e-12
    %v210 = vrsqrt.pop %v209
    %v211 = vmul.f32 %v203, %v210
    %v212 = vmul.f32 %v211, %v195
    %v213 = vadd.f32 %v212, %v196
    %v214 = vxor.u32 %v213, 2147483648
    %v215 = vmul.f32 %v214, 1.442695
    %v216 = vpow.pop %v215
    %v217 = vadd.f32 %v216, 1.0
    %v218 = vrcp.pop %v217
    %v219 = vmul.f32 1.0, %v218
    %s220 = scalar_lea.vmem %s0, 48
    %v221 = vld [vmem:[%s220] ss:$8 sm:$0x3]
    %s222 = scalar_lea.vmem %s0, 49
    %v223 = vld [vmem:[%s222] ss:$8 sm:$0x3]
    %v224 = vadd.f32 %v65, %v66
    %225 = vadd.xlane.f32.xlu0 %v224
    %v226 = vpop.xlane.xlu0 %225
    %v227 = vmul.f32 %v226, %v74
    %v228 = vsub.f32 %v65, %v227
    %v229 = vsub.f32 %v66, %v227
    %v230 = vmul.f32 %v228, %v228
    %v231 = vmul.f32 %v229, %v229
    %v232 = vadd.f32 %v230, %v231
    %233 = vadd.xlane.f32.xlu0 %v232
    %v234 = vpop.xlane.xlu0 %233
    %v235 = vmul.f32 %v234, %v74
    %v236 = vadd.f32 %v235, 1e-12
    %v237 = vrsqrt.pop %v236
    %v238 = vmul.f32 %v228, %v237
    %v239 = vmul.f32 %v229, %v237
    %v241 = vlaneseq
    %v242 = vshrl.u32 %v241, 7
    %v243 = vsub.s32 0, %v242
    %v244 = vrot.slane %v221, %v243
    %v245 = vlaneseq
    %v246 = vshrl.u32 %v245, 7
    %v247 = vsub.s32 1, %v246
    %v248 = vrot.slane %v221, %v247
    %v251 = vmul.f32 %v238, %v244
    %v252 = vmul.f32 %v239, %v248
    %v254 = vlaneseq
    %v255 = vshrl.u32 %v254, 7
    %v256 = vsub.s32 0, %v255
    %v257 = vrot.slane %v223, %v256
    %v258 = vlaneseq
    %v259 = vshrl.u32 %v258, 7
    %v260 = vsub.s32 1, %v259
    %v261 = vrot.slane %v223, %v260
    %v264 = vadd.f32 %v251, %v257
    %v265 = vadd.f32 %v252, %v261
    %v266 = vpack.c.bf16 %v264, %v264
    %v267 = vpack.c.bf16 %v265, %v265
    %v268 = vld [vmem:[#allocation2] sm:$0xff]
    %v269 = vld [vmem:[#allocation2 + $0x18] sm:$0xff]
    %v270 = vld [vmem:[#allocation2 + $0x30] sm:$0xff]
    %v271 = vld [vmem:[#allocation2 + $0x48] sm:$0xff]
    %v272 = vld [vmem:[#allocation2 + $0x60] sm:$0xff]
    %v273 = vld [vmem:[#allocation2 + $0x78] sm:$0xff]
    %v274 = vld [vmem:[#allocation2 + $0x90] sm:$0xff]
    %v275 = vld [vmem:[#allocation2 + $0xa8] sm:$0xff]
    %v276 = vld [vmem:[#allocation2 + $0xc0] sm:$0xff]
    %v277 = vld [vmem:[#allocation2 + $0xd8] sm:$0xff]
    %v278 = vld [vmem:[#allocation2 + $0xf0] sm:$0xff]
    %v279 = vld [vmem:[#allocation2 + $0x108] sm:$0xff]
    %v280 = vld [vmem:[#allocation2 + $0x120] sm:$0xff]
    %v281 = vld [vmem:[#allocation2 + $0x138] sm:$0xff]
    %v282 = vld [vmem:[#allocation2 + $0x150] sm:$0xff]
    %v283 = vld [vmem:[#allocation2 + $0x168] sm:$0xff]
    %v284 = vld [vmem:[#allocation2 + $0x180] sm:$0xff]
    %v285 = vld [vmem:[#allocation2 + $0x198] sm:$0xff]
    %v286 = vld [vmem:[#allocation2 + $0x1b0] sm:$0xff]
    %v287 = vld [vmem:[#allocation2 + $0x1c8] sm:$0xff]
    %v288 = vld [vmem:[#allocation2 + $0x1e0] sm:$0xff]
    %v289 = vld [vmem:[#allocation2 + $0x1f8] sm:$0xff]
    %v290 = vld [vmem:[#allocation2 + $0x210] sm:$0xff]
    %v291 = vld [vmem:[#allocation2 + $0x228] sm:$0xff]
    %v292 = vld [vmem:[#allocation2 + $0x240] sm:$0xff]
    %v293 = vld [vmem:[#allocation2 + $0x258] sm:$0xff]
    %v294 = vld [vmem:[#allocation2 + $0x270] sm:$0xff]
    %v295 = vld [vmem:[#allocation2 + $0x288] sm:$0xff]
    %v296 = vld [vmem:[#allocation2 + $0x2a0] sm:$0xff]
    %v297 = vld [vmem:[#allocation2 + $0x2b8] sm:$0xff]
    %v298 = vld [vmem:[#allocation2 + $0x2d0] sm:$0xff]
    %v299 = vld [vmem:[#allocation2 + $0x2e8] sm:$0xff]
    %s300 = scalar_lea.vmem %s0, 50
    %v301 = vld [vmem:[%s300] ss:$8 sm:$0x3]
    %v334 = vunpack.c.l.b16 %v268
    %v335 = vunpack.c.h.b16 %v268
    %v336 = vunpack.c.l.b16 %v269
    %v337 = vunpack.c.h.b16 %v269
    %v338 = vunpack.c.l.b16 %v270
    %v339 = vunpack.c.h.b16 %v270
    %v340 = vunpack.c.l.b16 %v271
    %v341 = vunpack.c.h.b16 %v271
    %v342 = vunpack.c.l.b16 %v272
    %v343 = vunpack.c.h.b16 %v272
    %v344 = vunpack.c.l.b16 %v273
    %v345 = vunpack.c.h.b16 %v273
    %v346 = vunpack.c.l.b16 %v274
    %v347 = vunpack.c.h.b16 %v274
    %v348 = vunpack.c.l.b16 %v275
    %v349 = vunpack.c.h.b16 %v275
    %v350 = vunpack.c.l.b16 %v276
    %v351 = vunpack.c.h.b16 %v276
    %v352 = vunpack.c.l.b16 %v277
    %v353 = vunpack.c.h.b16 %v277
    %v354 = vunpack.c.l.b16 %v278
    %v355 = vunpack.c.h.b16 %v278
    %v356 = vunpack.c.l.b16 %v279
    %v357 = vunpack.c.h.b16 %v279
    %v358 = vunpack.c.l.b16 %v280
    %v359 = vunpack.c.h.b16 %v280
    %v360 = vunpack.c.l.b16 %v281
    %v361 = vunpack.c.h.b16 %v281
    %v362 = vunpack.c.l.b16 %v282
    %v363 = vunpack.c.h.b16 %v282
    %v364 = vunpack.c.l.b16 %v283
    %v365 = vunpack.c.h.b16 %v283
    %v366 = vunpack.c.l.b16 %v284
    %v367 = vunpack.c.h.b16 %v284
    %v368 = vunpack.c.l.b16 %v285
    %v369 = vunpack.c.h.b16 %v285
    %v370 = vunpack.c.l.b16 %v286
    %v371 = vunpack.c.h.b16 %v286
    %v372 = vunpack.c.l.b16 %v287
    %v373 = vunpack.c.h.b16 %v287
    %v374 = vunpack.c.l.b16 %v288
    %v375 = vunpack.c.h.b16 %v288
    %v376 = vunpack.c.l.b16 %v289
    %v377 = vunpack.c.h.b16 %v289
    %v378 = vunpack.c.l.b16 %v290
    %v379 = vunpack.c.h.b16 %v290
    %v380 = vunpack.c.l.b16 %v291
    %v381 = vunpack.c.h.b16 %v291
    %v382 = vunpack.c.l.b16 %v292
    %v383 = vunpack.c.h.b16 %v292
    %v384 = vunpack.c.l.b16 %v293
    %v385 = vunpack.c.h.b16 %v293
    %v386 = vunpack.c.l.b16 %v294
    %v387 = vunpack.c.h.b16 %v294
    %v388 = vunpack.c.l.b16 %v295
    %v389 = vunpack.c.h.b16 %v295
    %v390 = vunpack.c.l.b16 %v296
    %v391 = vunpack.c.h.b16 %v296
    %v392 = vunpack.c.l.b16 %v297
    %v393 = vunpack.c.h.b16 %v297
    %v394 = vunpack.c.l.b16 %v298
    %v395 = vunpack.c.h.b16 %v298
    %v396 = vunpack.c.l.b16 %v299
    %v397 = vunpack.c.h.b16 %v299
    %v398 = vpack.c.b16 %v336, %v334
    %v399 = vpack.c.b16 %v337, %v335
    %v400 = vpack.c.b16 %v340, %v338
    %v401 = vpack.c.b16 %v341, %v339
    %v402 = vpack.c.b16 %v344, %v342
    %v403 = vpack.c.b16 %v345, %v343
    %v404 = vpack.c.b16 %v348, %v346
    %v405 = vpack.c.b16 %v349, %v347
    %v406 = vpack.c.b16 %v352, %v350
    %v407 = vpack.c.b16 %v353, %v351
    %v408 = vpack.c.b16 %v356, %v354
    %v409 = vpack.c.b16 %v357, %v355
    %v410 = vpack.c.b16 %v360, %v358
    %v411 = vpack.c.b16 %v361, %v359
    %v412 = vpack.c.b16 %v364, %v362
    %v413 = vpack.c.b16 %v365, %v363
    %v414 = vpack.c.b16 %v368, %v366
    %v415 = vpack.c.b16 %v369, %v367
    %v416 = vpack.c.b16 %v372, %v370
    %v417 = vpack.c.b16 %v373, %v371
    %v418 = vpack.c.b16 %v376, %v374
    %v419 = vpack.c.b16 %v377, %v375
    %v420 = vpack.c.b16 %v380, %v378
    %v421 = vpack.c.b16 %v381, %v379
    %v422 = vpack.c.b16 %v384, %v382
    %v423 = vpack.c.b16 %v385, %v383
    %v424 = vpack.c.b16 %v388, %v386
    %v425 = vpack.c.b16 %v389, %v387
    %v426 = vpack.c.b16 %v392, %v390
    %v427 = vpack.c.b16 %v393, %v391
    %v428 = vpack.c.b16 %v396, %v394
    %v429 = vpack.c.b16 %v397, %v395
    %v463 = vlaneseq
    %v464 = vshrl.u32 %v463, 7
    %v465 = vsub.s32 0, %v464
    %v466 = vrot.slane %v301, %v465
    %v467 = vlaneseq
    %v468 = vshrl.u32 %v467, 7
    %v469 = vsub.s32 1, %v468
    %v470 = vrot.slane %v301, %v469
    %473 = vmatprep.subr.bf16.mxu0 %v399
    %474 = vmatpush1.bf16.msra.mxu0 %v398
    %475 = vmatprep.subr.bf16.mxu0 %v401
    %476 = vmatpush1.bf16.msra.mxu0 %v400
    %477 = vmatprep.subr.bf16.mxu0 %v403
    %478 = vmatpush1.bf16.msra.mxu0 %v402
    %479 = vmatprep.subr.bf16.mxu0 %v405
    %480 = vmatpush1.bf16.msra.mxu0 %v404
    %481 = vmatprep.subr.bf16.mxu0 %v407
    %482 = vmatpush1.bf16.msra.mxu0 %v406
    %483 = vmatprep.subr.bf16.mxu0 %v409
    %484 = vmatpush1.bf16.msra.mxu0 %v408
    %485 = vmatprep.subr.bf16.mxu0 %v411
    %486 = vmatpush1.bf16.msra.mxu0 %v410
    %487 = vmatprep.subr.bf16.mxu0 %v413
    %488 = vmatpush1.bf16.msra.mxu0 %v412
    %489 = vmatprep.subr.bf16.mxu0 %v415
    %490 = vmatpush1.bf16.msra.mxu0 %v414
    %491 = vmatprep.subr.bf16.mxu0 %v417
    %492 = vmatpush1.bf16.msra.mxu0 %v416
    %493 = vmatprep.subr.bf16.mxu0 %v419
    %494 = vmatpush1.bf16.msra.mxu0 %v418
    %495 = vmatprep.subr.bf16.mxu0 %v421
    %496 = vmatpush1.bf16.msra.mxu0 %v420
    %497 = vmatprep.subr.bf16.mxu0 %v423
    %498 = vmatpush1.bf16.msra.mxu0 %v422
    %499 = vmatprep.subr.bf16.mxu0 %v425
    %500 = vmatpush1.bf16.msra.mxu0 %v424
    %501 = vmatprep.subr.bf16.mxu0 %v427
    %502 = vmatpush1.bf16.msra.mxu0 %v426
    %503 = vmatprep.subr.bf16.mxu0 %v429
    %504 = vmatpush1.bf16.msra.mxu0 %v428
    %505 = vmatprep.mubr.bf16.mxu0 %v267
    %506 = vmatmul.mubr.bf16.gmra.mrb[0].mxu0 %v266
    %v507 = vpop.f32.mrb[0].mxu0
    %v508 = vadd.f32 %v466, %v507
    %v509 = vpop.f32.mrb[0].mxu0
    %v510 = vadd.f32 %v470, %v509
    %v511 = vpop.f32.mrb[0].mxu0
    %v512 = vpop.f32.mrb[0].mxu0
    %513 = vdwg.mxu0
    %v514 = vmax.f32 %v508, 0.0
    %v515 = vmax.f32 %v510, 0.0
    %s516 = scalar_lea.vmem %s0, 51
    %v517 = vld [vmem:[%s516] ss:$8 sm:$0x3]
    %s518 = scalar_lea.vmem %s0, 52
    %v519 = vld [vmem:[%s518] ss:$8 sm:$0x3]
    %vm520 = vcmask 1040384
    %v521 = vsel %vm520, %v514, 0.0
    %v522 = vsel %vm520, %v515, 0.0
    %v523 = vadd.f32 %v521, %v522
    %524 = vadd.xlane.f32.xlu0 %v523
    %v525 = vpop.xlane.xlu0 %524
    %v526 = vmul.f32 %v525, %v74
    %v527 = vsub.f32 %v514, %v526
    %v528 = vsub.f32 %v515, %v526
    %v529 = vmul.f32 %v527, %v527
    %v530 = vmul.f32 %v528, %v528
    %v531 = vsel %vm520, %v529, 0.0
    %v532 = vsel %vm520, %v530, 0.0
    %v533 = vadd.f32 %v531, %v532
    %534 = vadd.xlane.f32.xlu0 %v533
    %v535 = vpop.xlane.xlu0 %534
    %v536 = vmul.f32 %v535, %v74
    %v537 = vadd.f32 %v536, 1e-12
    %v538 = vrsqrt.pop %v537
    %v539 = vmul.f32 %v527, %v538
    %v540 = vmul.f32 %v528, %v538
    %v542 = vlaneseq
    %v543 = vshrl.u32 %v542, 7
    %v544 = vsub.s32 0, %v543
    %v545 = vrot.slane %v517, %v544
    %v546 = vlaneseq
    %v547 = vshrl.u32 %v546, 7
    %v548 = vsub.s32 1, %v547
    %v549 = vrot.slane %v517, %v548
    %v552 = vmul.f32 %v539, %v545
    %v553 = vmul.f32 %v540, %v549
    %v555 = vlaneseq
    %v556 = vshrl.u32 %v555, 7
    %v557 = vsub.s32 0, %v556
    %v558 = vrot.slane %v519, %v557
    %v559 = vlaneseq
    %v560 = vshrl.u32 %v559, 7
    %v561 = vsub.s32 1, %v560
    %v562 = vrot.slane %v519, %v561
    %v565 = vadd.f32 %v552, %v558
    %v566 = vadd.f32 %v553, %v562
    %s567 = scalar_lea.vmem %s0, 53
    %v568 = vld [vmem:[%s567] ss:$8 sm:$0x3]
    %s569 = scalar_lea.vmem %s0, 54
    %v570 = vld [vmem:[%s569] ss:$8 sm:$0x3]
    %v572 = vlaneseq
    %v573 = vshrl.u32 %v572, 7
    %v574 = vsub.s32 0, %v573
    %v575 = vrot.slane %v568, %v574
    %v576 = vlaneseq
    %v577 = vshrl.u32 %v576, 7
    %v578 = vsub.s32 1, %v577
    %v579 = vrot.slane %v568, %v578
    %v583 = vlaneseq
    %v584 = vshrl.u32 %v583, 7
    %v585 = vsub.s32 0, %v584
    %v586 = vrot.slane %v570, %v585
    %v587 = vlaneseq
    %v588 = vshrl.u32 %v587, 7
    %v589 = vsub.s32 1, %v588
    %v590 = vrot.slane %v570, %v589
    %v593 = vpack.c.bf16 %v565, %v565
    %v594 = vpack.c.bf16 %v566, %v566
    %v595 = vld [vmem:[#allocation2 + $0x8] sm:$0xff]
    %v596 = vld [vmem:[#allocation2 + $0x10] sm:$0xff]
    %v597 = vld [vmem:[#allocation2 + $0x20] sm:$0xff]
    %v598 = vld [vmem:[#allocation2 + $0x28] sm:$0xff]
    %v599 = vld [vmem:[#allocation2 + $0x38] sm:$0xff]
    %v600 = vld [vmem:[#allocation2 + $0x40] sm:$0xff]
    %v601 = vld [vmem:[#allocation2 + $0x50] sm:$0xff]
    %v602 = vld [vmem:[#allocation2 + $0x58] sm:$0xff]
    %v603 = vld [vmem:[#allocation2 + $0x68] sm:$0xff]
    %v604 = vld [vmem:[#allocation2 + $0x70] sm:$0xff]
    %v605 = vld [vmem:[#allocation2 + $0x80] sm:$0xff]
    %v606 = vld [vmem:[#allocation2 + $0x88] sm:$0xff]
    %v607 = vld [vmem:[#allocation2 + $0x98] sm:$0xff]
    %v608 = vld [vmem:[#allocation2 + $0xa0] sm:$0xff]
    %v609 = vld [vmem:[#allocation2 + $0xb0] sm:$0xff]
    %v610 = vld [vmem:[#allocation2 + $0xb8] sm:$0xff]
    %v611 = vld [vmem:[#allocation2 + $0xc8] sm:$0xff]
    %v612 = vld [vmem:[#allocation2 + $0xd0] sm:$0xff]
    %v613 = vld [vmem:[#allocation2 + $0xe0] sm:$0xff]
    %v614 = vld [vmem:[#allocation2 + $0xe8] sm:$0xff]
    %v615 = vld [vmem:[#allocation2 + $0xf8] sm:$0xff]
    %v616 = vld [vmem:[#allocation2 + $0x100] sm:$0xff]
    %v617 = vld [vmem:[#allocation2 + $0x110] sm:$0xff]
    %v618 = vld [vmem:[#allocation2 + $0x118] sm:$0xff]
    %v619 = vld [vmem:[#allocation2 + $0x128] sm:$0xff]
    %v620 = vld [vmem:[#allocation2 + $0x130] sm:$0xff]
    %v621 = vld [vmem:[#allocation2 + $0x140] sm:$0xff]
    %v622 = vld [vmem:[#allocation2 + $0x148] sm:$0xff]
    %v623 = vld [vmem:[#allocation2 + $0x158] sm:$0xff]
    %v624 = vld [vmem:[#allocation2 + $0x160] sm:$0xff]
    %v625 = vld [vmem:[#allocation2 + $0x170] sm:$0xff]
    %v626 = vld [vmem:[#allocation2 + $0x178] sm:$0xff]
    %v627 = vld [vmem:[#allocation2 + $0x188] sm:$0xff]
    %v628 = vld [vmem:[#allocation2 + $0x190] sm:$0xff]
    %v629 = vld [vmem:[#allocation2 + $0x1a0] sm:$0xff]
    %v630 = vld [vmem:[#allocation2 + $0x1a8] sm:$0xff]
    %v631 = vld [vmem:[#allocation2 + $0x1b8] sm:$0xff]
    %v632 = vld [vmem:[#allocation2 + $0x1c0] sm:$0xff]
    %v633 = vld [vmem:[#allocation2 + $0x1d0] sm:$0xff]
    %v634 = vld [vmem:[#allocation2 + $0x1d8] sm:$0xff]
    %v635 = vld [vmem:[#allocation2 + $0x1e8] sm:$0xff]
    %v636 = vld [vmem:[#allocation2 + $0x1f0] sm:$0xff]
    %v637 = vld [vmem:[#allocation2 + $0x200] sm:$0xff]
    %v638 = vld [vmem:[#allocation2 + $0x208] sm:$0xff]
    %v639 = vld [vmem:[#allocation2 + $0x218] sm:$0xff]
    %v640 = vld [vmem:[#allocation2 + $0x220] sm:$0xff]
    %v641 = vld [vmem:[#allocation2 + $0x230] sm:$0xff]
    %v642 = vld [vmem:[#allocation2 + $0x238] sm:$0xff]
    %v643 = vld [vmem:[#allocation2 + $0x248] sm:$0xff]
    %v644 = vld [vmem:[#allocation2 + $0x250] sm:$0xff]
    %v645 = vld [vmem:[#allocation2 + $0x260] sm:$0xff]
    %v646 = vld [vmem:[#allocation2 + $0x268] sm:$0xff]
    %v647 = vld [vmem:[#allocation2 + $0x278] sm:$0xff]
    %v648 = vld [vmem:[#allocation2 + $0x280] sm:$0xff]
    %v649 = vld [vmem:[#allocation2 + $0x290] sm:$0xff]
    %v650 = vld [vmem:[#allocation2 + $0x298] sm:$0xff]
    %v651 = vld [vmem:[#allocation2 + $0x2a8] sm:$0xff]
    %v652 = vld [vmem:[#allocation2 + $0x2b0] sm:$0xff]
    %v653 = vld [vmem:[#allocation2 + $0x2c0] sm:$0xff]
    %v654 = vld [vmem:[#allocation2 + $0x2c8] sm:$0xff]
    %v655 = vld [vmem:[#allocation2 + $0x2d8] sm:$0xff]
    %v656 = vld [vmem:[#allocation2 + $0x2e0] sm:$0xff]
    %v657 = vld [vmem:[#allocation2 + $0x2f0] sm:$0xff]
    %v658 = vld [vmem:[#allocation2 + $0x2f8] sm:$0xff]
    %v723 = vunpack.c.l.b16 %v595
    %v724 = vunpack.c.h.b16 %v595
    %v725 = vunpack.c.l.b16 %v596
    %v726 = vunpack.c.h.b16 %v596
    %v727 = vunpack.c.l.b16 %v597
    %v728 = vunpack.c.h.b16 %v597
    %v729 = vunpack.c.l.b16 %v598
    %v730 = vunpack.c.h.b16 %v598
    %v731 = vunpack.c.l.b16 %v599
    %v732 = vunpack.c.h.b16 %v599
    %v733 = vunpack.c.l.b16 %v600
    %v734 = vunpack.c.h.b16 %v600
    %v735 = vunpack.c.l.b16 %v601
    %v736 = vunpack.c.h.b16 %v601
    %v737 = vunpack.c.l.b16 %v602
    %v738 = vunpack.c.h.b16 %v602
    %v739 = vunpack.c.l.b16 %v603
    %v740 = vunpack.c.h.b16 %v603
    %v741 = vunpack.c.l.b16 %v604
    %v742 = vunpack.c.h.b16 %v604
    %v743 = vunpack.c.l.b16 %v605
    %v744 = vunpack.c.h.b16 %v605
    %v745 = vunpack.c.l.b16 %v606
    %v746 = vunpack.c.h.b16 %v606
    %v747 = vunpack.c.l.b16 %v607
    %v748 = vunpack.c.h.b16 %v607
    %v749 = vunpack.c.l.b16 %v608
    %v750 = vunpack.c.h.b16 %v608
    %v751 = vunpack.c.l.b16 %v609
    %v752 = vunpack.c.h.b16 %v609
    %v753 = vunpack.c.l.b16 %v610
    %v754 = vunpack.c.h.b16 %v610
    %v755 = vunpack.c.l.b16 %v611
    %v756 = vunpack.c.h.b16 %v611
    %v757 = vunpack.c.l.b16 %v612
    %v758 = vunpack.c.h.b16 %v612
    %v759 = vunpack.c.l.b16 %v613
    %v760 = vunpack.c.h.b16 %v613
    %v761 = vunpack.c.l.b16 %v614
    %v762 = vunpack.c.h.b16 %v614
    %v763 = vunpack.c.l.b16 %v615
    %v764 = vunpack.c.h.b16 %v615
    %v765 = vunpack.c.l.b16 %v616
    %v766 = vunpack.c.h.b16 %v616
    %v767 = vunpack.c.l.b16 %v617
    %v768 = vunpack.c.h.b16 %v617
    %v769 = vunpack.c.l.b16 %v618
    %v770 = vunpack.c.h.b16 %v618
    %v771 = vunpack.c.l.b16 %v619
    %v772 = vunpack.c.h.b16 %v619
    %v773 = vunpack.c.l.b16 %v620
    %v774 = vunpack.c.h.b16 %v620
    %v775 = vunpack.c.l.b16 %v621
    %v776 = vunpack.c.h.b16 %v621
    %v777 = vunpack.c.l.b16 %v622
    %v778 = vunpack.c.h.b16 %v622
    %v779 = vunpack.c.l.b16 %v623
    %v780 = vunpack.c.h.b16 %v623
    %v781 = vunpack.c.l.b16 %v624
    %v782 = vunpack.c.h.b16 %v624
    %v783 = vunpack.c.l.b16 %v625
    %v784 = vunpack.c.h.b16 %v625
    %v785 = vunpack.c.l.b16 %v626
    %v786 = vunpack.c.h.b16 %v626
    %v787 = vunpack.c.l.b16 %v627
    %v788 = vunpack.c.h.b16 %v627
    %v789 = vunpack.c.l.b16 %v628
    %v790 = vunpack.c.h.b16 %v628
    %v791 = vunpack.c.l.b16 %v629
    %v792 = vunpack.c.h.b16 %v629
    %v793 = vunpack.c.l.b16 %v630
    %v794 = vunpack.c.h.b16 %v630
    %v795 = vunpack.c.l.b16 %v631
    %v796 = vunpack.c.h.b16 %v631
    %v797 = vunpack.c.l.b16 %v632
    %v798 = vunpack.c.h.b16 %v632
    %v799 = vunpack.c.l.b16 %v633
    %v800 = vunpack.c.h.b16 %v633
    %v801 = vunpack.c.l.b16 %v634
    %v802 = vunpack.c.h.b16 %v634
    %v803 = vunpack.c.l.b16 %v635
    %v804 = vunpack.c.h.b16 %v635
    %v805 = vunpack.c.l.b16 %v636
    %v806 = vunpack.c.h.b16 %v636
    %v807 = vunpack.c.l.b16 %v637
    %v808 = vunpack.c.h.b16 %v637
    %v809 = vunpack.c.l.b16 %v638
    %v810 = vunpack.c.h.b16 %v638
    %v811 = vunpack.c.l.b16 %v639
    %v812 = vunpack.c.h.b16 %v639
    %v813 = vunpack.c.l.b16 %v640
    %v814 = vunpack.c.h.b16 %v640
    %v815 = vunpack.c.l.b16 %v641
    %v816 = vunpack.c.h.b16 %v641
    %v817 = vunpack.c.l.b16 %v642
    %v818 = vunpack.c.h.b16 %v642
    %v819 = vunpack.c.l.b16 %v643
    %v820 = vunpack.c.h.b16 %v643
    %v821 = vunpack.c.l.b16 %v644
    %v822 = vunpack.c.h.b16 %v644
    %v823 = vunpack.c.l.b16 %v645
    %v824 = vunpack.c.h.b16 %v645
    %v825 = vunpack.c.l.b16 %v646
    %v826 = vunpack.c.h.b16 %v646
    %v827 = vunpack.c.l.b16 %v647
    %v828 = vunpack.c.h.b16 %v647
    %v829 = vunpack.c.l.b16 %v648
    %v830 = vunpack.c.h.b16 %v648
    %v831 = vunpack.c.l.b16 %v649
    %v832 = vunpack.c.h.b16 %v649
    %v833 = vunpack.c.l.b16 %v650
    %v834 = vunpack.c.h.b16 %v650
    %v835 = vunpack.c.l.b16 %v651
    %v836 = vunpack.c.h.b16 %v651
    %v837 = vunpack.c.l.b16 %v652
    %v838 = vunpack.c.h.b16 %v652
    %v839 = vunpack.c.l.b16 %v653
    %v840 = vunpack.c.h.b16 %v653
    %v841 = vunpack.c.l.b16 %v654
    %v842 = vunpack.c.h.b16 %v654
    %v843 = vunpack.c.l.b16 %v655
    %v844 = vunpack.c.h.b16 %v655
    %v845 = vunpack.c.l.b16 %v656
    %v846 = vunpack.c.h.b16 %v656
    %v847 = vunpack.c.l.b16 %v657
    %v848 = vunpack.c.h.b16 %v657
    %v849 = vunpack.c.l.b16 %v658
    %v850 = vunpack.c.h.b16 %v658
    %v851 = vpack.c.b16 %v727, %v723
    %v852 = vpack.c.b16 %v728, %v724
    %v853 = vpack.c.b16 %v729, %v725
    %v854 = vpack.c.b16 %v730, %v726
    %v855 = vpack.c.b16 %v735, %v731
    %v856 = vpack.c.b16 %v736, %v732
    %v857 = vpack.c.b16 %v737, %v733
    %v858 = vpack.c.b16 %v738, %v734
    %v859 = vpack.c.b16 %v743, %v739
    %v860 = vpack.c.b16 %v744, %v740
    %v861 = vpack.c.b16 %v745, %v741
    %v862 = vpack.c.b16 %v746, %v742
    %v863 = vpack.c.b16 %v751, %v747
    %v864 = vpack.c.b16 %v752, %v748
    %v865 = vpack.c.b16 %v753, %v749
    %v866 = vpack.c.b16 %v754, %v750
    %v867 = vpack.c.b16 %v759, %v755
    %v868 = vpack.c.b16 %v760, %v756
    %v869 = vpack.c.b16 %v761, %v757
    %v870 = vpack.c.b16 %v762, %v758
    %v871 = vpack.c.b16 %v767, %v763
    %v872 = vpack.c.b16 %v768, %v764
    %v873 = vpack.c.b16 %v769, %v765
    %v874 = vpack.c.b16 %v770, %v766
    %v875 = vpack.c.b16 %v775, %v771
    %v876 = vpack.c.b16 %v776, %v772
    %v877 = vpack.c.b16 %v777, %v773
    %v878 = vpack.c.b16 %v778, %v774
    %v879 = vpack.c.b16 %v783, %v779
    %v880 = vpack.c.b16 %v784, %v780
    %v881 = vpack.c.b16 %v785, %v781
    %v882 = vpack.c.b16 %v786, %v782
    %v883 = vpack.c.b16 %v791, %v787
    %v884 = vpack.c.b16 %v792, %v788
    %v885 = vpack.c.b16 %v793, %v789
    %v886 = vpack.c.b16 %v794, %v790
    %v887 = vpack.c.b16 %v799, %v795
    %v888 = vpack.c.b16 %v800, %v796
    %v889 = vpack.c.b16 %v801, %v797
    %v890 = vpack.c.b16 %v802, %v798
    %v891 = vpack.c.b16 %v807, %v803
    %v892 = vpack.c.b16 %v808, %v804
    %v893 = vpack.c.b16 %v809, %v805
    %v894 = vpack.c.b16 %v810, %v806
    %v895 = vpack.c.b16 %v815, %v811
    %v896 = vpack.c.b16 %v816, %v812
    %v897 = vpack.c.b16 %v817, %v813
    %v898 = vpack.c.b16 %v818, %v814
    %v899 = vpack.c.b16 %v823, %v819
    %v900 = vpack.c.b16 %v824, %v820
    %v901 = vpack.c.b16 %v825, %v821
    %v902 = vpack.c.b16 %v826, %v822
    %v903 = vpack.c.b16 %v831, %v827
    %v904 = vpack.c.b16 %v832, %v828
    %v905 = vpack.c.b16 %v833, %v829
    %v906 = vpack.c.b16 %v834, %v830
    %v907 = vpack.c.b16 %v839, %v835
    %v908 = vpack.c.b16 %v840, %v836
    %v909 = vpack.c.b16 %v841, %v837
    %v910 = vpack.c.b16 %v842, %v838
    %v911 = vpack.c.b16 %v847, %v843
    %v912 = vpack.c.b16 %v848, %v844
    %v913 = vpack.c.b16 %v849, %v845
    %v914 = vpack.c.b16 %v850, %v846
    %979 = vmatprep.subr.bf16.mxu0 %v852
    %980 = vmatpush1.bf16.msra.mxu0 %v851
    %981 = vmatprep.subr.bf16.mxu0 %v856
    %982 = vmatpush1.bf16.msra.mxu0 %v855
    %983 = vmatprep.subr.bf16.mxu0 %v860
    %984 = vmatpush1.bf16.msra.mxu0 %v859
    %985 = vmatprep.subr.bf16.mxu0 %v864
    %986 = vmatpush1.bf16.msra.mxu0 %v863
    %987 = vmatprep.subr.bf16.mxu0 %v868
    %988 = vmatpush1.bf16.msra.mxu0 %v867
    %989 = vmatprep.subr.bf16.mxu0 %v872
    %990 = vmatpush1.bf16.msra.mxu0 %v871
    %991 = vmatprep.subr.bf16.mxu0 %v876
    %992 = vmatpush1.bf16.msra.mxu0 %v875
    %993 = vmatprep.subr.bf16.mxu0 %v880
    %994 = vmatpush1.bf16.msra.mxu0 %v879
    %995 = vmatprep.subr.bf16.mxu0 %v884
    %996 = vmatpush1.bf16.msra.mxu0 %v883
    %997 = vmatprep.subr.bf16.mxu0 %v888
    %998 = vmatpush1.bf16.msra.mxu0 %v887
    %999 = vmatprep.subr.bf16.mxu0 %v892
    %1000 = vmatpush1.bf16.msra.mxu0 %v891
    %1001 = vmatprep.subr.bf16.mxu0 %v896
    %1002 = vmatpush1.bf16.msra.mxu0 %v895
    %1003 = vmatprep.subr.bf16.mxu0 %v900
    %1004 = vmatpush1.bf16.msra.mxu0 %v899
    %1005 = vmatprep.subr.bf16.mxu0 %v904
    %1006 = vmatpush1.bf16.msra.mxu0 %v903
    %1007 = vmatprep.subr.bf16.mxu0 %v908
    %1008 = vmatpush1.bf16.msra.mxu0 %v907
    %1009 = vmatprep.subr.bf16.mxu0 %v912
    %1010 = vmatpush1.bf16.msra.mxu0 %v911
    %1011 = vmatprep.mubr.bf16.mxu0 %v594
    %1012 = vmatmul.mubr.bf16.gmra.mrb[0].mxu0 %v593
    %v1013 = vpop.f32.mrb[0].mxu0
    %v1014 = vadd.f32 %v575, %v1013
    %v1015 = vpop.f32.mrb[0].mxu0
    %v1016 = vadd.f32 %v579, %v1015
    %v1017 = vpop.f32.mrb[0].mxu0
    %v1018 = vpop.f32.mrb[0].mxu0
    %1019 = vdwg.mxu0
    %1020 = vmatprep.subr.bf16.mxu0 %v854
    %1021 = vmatpush1.bf16.msra.mxu0 %v853
    %1022 = vmatprep.subr.bf16.mxu0 %v858
    %1023 = vmatpush1.bf16.msra.mxu0 %v857
    %1024 = vmatprep.subr.bf16.mxu0 %v862
    %1025 = vmatpush1.bf16.msra.mxu0 %v861
    %1026 = vmatprep.subr.bf16.mxu0 %v866
    %1027 = vmatpush1.bf16.msra.mxu0 %v865
    %1028 = vmatprep.subr.bf16.mxu0 %v870
    %1029 = vmatpush1.bf16.msra.mxu0 %v869
    %1030 = vmatprep.subr.bf16.mxu0 %v874
    %1031 = vmatpush1.bf16.msra.mxu0 %v873
    %1032 = vmatprep.subr.bf16.mxu0 %v878
    %1033 = vmatpush1.bf16.msra.mxu0 %v877
    %1034 = vmatprep.subr.bf16.mxu0 %v882
    %1035 = vmatpush1.bf16.msra.mxu0 %v881
    %1036 = vmatprep.subr.bf16.mxu0 %v886
    %1037 = vmatpush1.bf16.msra.mxu0 %v885
    %1038 = vmatprep.subr.bf16.mxu0 %v890
    %1039 = vmatpush1.bf16.msra.mxu0 %v889
    %1040 = vmatprep.subr.bf16.mxu0 %v894
    %1041 = vmatpush1.bf16.msra.mxu0 %v893
    %1042 = vmatprep.subr.bf16.mxu0 %v898
    %1043 = vmatpush1.bf16.msra.mxu0 %v897
    %1044 = vmatprep.subr.bf16.mxu0 %v902
    %1045 = vmatpush1.bf16.msra.mxu0 %v901
    %1046 = vmatprep.subr.bf16.mxu0 %v906
    %1047 = vmatpush1.bf16.msra.mxu0 %v905
    %1048 = vmatprep.subr.bf16.mxu0 %v910
    %1049 = vmatpush1.bf16.msra.mxu0 %v909
    %1050 = vmatprep.subr.bf16.mxu0 %v914
    %1051 = vmatpush1.bf16.msra.mxu0 %v913
    %1052 = vmatprep.mubr.bf16.mxu0 %v594
    %1053 = vmatmul.mubr.bf16.gmra.mrb[0].mxu0 %v593
    %v1054 = vpop.f32.mrb[0].mxu0
    %v1055 = vadd.f32 %v586, %v1054
    %v1056 = vpop.f32.mrb[0].mxu0
    %v1057 = vadd.f32 %v590, %v1056
    %v1058 = vpop.f32.mrb[0].mxu0
    %v1059 = vpop.f32.mrb[0].mxu0
    %1060 = vdwg.mxu0
    %v1061 = vmax.f32 %v1014, 0.0
    %v1062 = vmax.f32 %v1016, 0.0
    %v1063 = vmax.f32 %v1055, 0.0
    %v1064 = vmax.f32 %v1057, 0.0
    %s1065 = scalar_lea.vmem %s0, 55
    %v1066 = vld [vmem:[%s1065] ss:$8 sm:$0x3]
    %v1068 = vlaneseq
    %v1069 = vshrl.u32 %v1068, 7
    %v1070 = vsub.s32 0, %v1069
    %v1071 = vrot.slane %v1066, %v1070
    %v1072 = vlaneseq
    %v1073 = vshrl.u32 %v1072, 7
    %v1074 = vsub.s32 1, %v1073
    %v1075 = vrot.slane %v1066, %v1074
    %v1078 = vmul.f32 %v1061, %v1071
    %v1079 = vmul.f32 %v1062, %v1075
    %v1080 = vsel %vm520, %v1078, 0.0
    %v1081 = vsel %vm520, %v1079, 0.0
    %v1082 = vadd.f32 %v1080, %v1081
    %1083 = vadd.xlane.f32.xlu0 %v1082
    %v1084 = vpop.xlane.xlu0 %1083
    %v1085 = vld [vmem:[%s0 + $0x50] ss:$0 sm:$0xff]
    %v1086 = vadd.f32 %v1084, %v1085
    %s1087 = scalar_lea.vmem %s0, 64
    %v1088 = vld [vmem:[%s1087] ss:$8 sm:$0x3]
    %v1090 = vlaneseq
    %v1091 = vshrl.u32 %v1090, 7
    %v1092 = vsub.s32 0, %v1091
    %v1093 = vrot.slane %v1088, %v1092
    %v1094 = vlaneseq
    %v1095 = vshrl.u32 %v1094, 7
    %v1096 = vsub.s32 1, %v1095
    %v1097 = vrot.slane %v1088, %v1096
    %v1100 = vmul.f32 %v1061, %v1093
    %v1101 = vmul.f32 %v1062, %v1097
    %v1102 = vsel %vm520, %v1100, 0.0
    %v1103 = vsel %vm520, %v1101, 0.0
    %v1104 = vadd.f32 %v1102, %v1103
    %1105 = vadd.xlane.f32.xlu0 %v1104
    %v1106 = vpop.xlane.xlu0 %1105
    %v1107 = vadd.f32 %v1106, %v1085
    %s1108 = scalar_lea.vmem %s0, 65
    %v1109 = vld [vmem:[%s1108] ss:$8 sm:$0x3]
    %v1111 = vlaneseq
    %v1112 = vshrl.u32 %v1111, 7
    %v1113 = vsub.s32 0, %v1112
    %v1114 = vrot.slane %v1109, %v1113
    %v1115 = vlaneseq
    %v1116 = vshrl.u32 %v1115, 7
    %v1117 = vsub.s32 1, %v1116
    %v1118 = vrot.slane %v1109, %v1117
    %v1121 = vmul.f32 %v1063, %v1114
    %v1122 = vmul.f32 %v1064, %v1118
    %v1123 = vsel %vm520, %v1121, 0.0
    %v1124 = vsel %vm520, %v1122, 0.0
    %v1125 = vadd.f32 %v1123, %v1124
    %1126 = vadd.xlane.f32.xlu0 %v1125
    %v1127 = vpop.xlane.xlu0 %1126
    %v1128 = vld [vmem:[%s0 + $0x51] ss:$0 sm:$0xff]
    %v1129 = vadd.f32 %v1127, %v1128
    %v1130 = vsel %vm186, %v1086, %v1107
    %v1131 = vlaneseq
    %v1132 = vshrl.u32 %v1131, 7
    %v1133 = vsub.s32 0, %v1132
    %v1134 = vrot.slane %v1130, %v1133
    %v1135 = vlaneseq
    %v1136 = vshrl.u32 %v1135, 7
    %v1137 = vsub.s32 0, %v1136
    %v1138 = vrot.slane %v1129, %v1137
    %v1139 = vld [vmem:[%s0 + $0x45] ss:$0 sm:$0xff]
    %v1140 = vld [vmem:[%s0 + $0x52] ss:$0 sm:$0xff]
    %1142 = vset.pattern.permute.xlu0 0
    %1143 = vperm.xlu0 %1142, %v219
    %v1144 = vpop.permute.xlu0 %1143
    %v1146 = vmul.f32 %v1144, %v1140
    %v1147 = vadd.f32 %v1139, %v1146
    %v1148 = vld [vmem:[%s0 + $0x53] ss:$0 sm:$0xff]
    %1149 = vset.pattern.permute.xlu0 1
    %1150 = vperm.xlu0 %1149, %v219
    %v1151 = vpop.permute.xlu0 %1150
    %v1153 = vmul.f32 %v1151, %v1148
    %v1154 = vadd.f32 %v1147, %v1153
    %v1155 = vld [vmem:[%s0 + $0x54] ss:$0 sm:$0xff]
    %1156 = vset.pattern.permute.xlu0 2
    %1157 = vperm.xlu0 %1156, %v219
    %v1158 = vpop.permute.xlu0 %1157
    %v1160 = vmul.f32 %v1158, %v1155
    %v1161 = vadd.f32 %v1154, %v1160
    %v1162 = vld [vmem:[%s0 + $0x55] ss:$0 sm:$0xff]
    %1163 = vset.pattern.permute.xlu0 3
    %1164 = vperm.xlu0 %1163, %v219
    %v1165 = vpop.permute.xlu0 %1164
    %v1167 = vmul.f32 %v1165, %v1162
    %v1168 = vadd.f32 %v1161, %v1167
    %v1169 = vmax.f32 %v1168, 0.0
    %v1170 = vld [vmem:[%s0 + $0x46] ss:$0 sm:$0xff]
    %v1171 = vld [vmem:[%s0 + $0x56] ss:$0 sm:$0xff]
    %1173 = vset.pattern.permute.xlu0 0
    %1174 = vperm.xlu0 %1173, %v1169
    %v1175 = vpop.permute.xlu0 %1174
    %v1177 = vmul.f32 %v1175, %v1171
    %v1178 = vadd.f32 %v1170, %v1177
    %v1179 = vld [vmem:[%s0 + $0x57] ss:$0 sm:$0xff]
    %1180 = vset.pattern.permute.xlu0 1
    %1181 = vperm.xlu0 %1180, %v1169
    %v1182 = vpop.permute.xlu0 %1181
    %v1184 = vmul.f32 %v1182, %v1179
    %v1185 = vadd.f32 %v1178, %v1184
    %v1186 = vld [vmem:[%s0 + $0x60] ss:$0 sm:$0xff]
    %1187 = vset.pattern.permute.xlu0 2
    %1188 = vperm.xlu0 %1187, %v1169
    %v1189 = vpop.permute.xlu0 %1188
    %v1191 = vmul.f32 %v1189, %v1186
    %v1192 = vadd.f32 %v1185, %v1191
    %v1193 = vld [vmem:[%s0 + $0x61] ss:$0 sm:$0xff]
    %1194 = vset.pattern.permute.xlu0 3
    %1195 = vperm.xlu0 %1194, %v1169
    %v1196 = vpop.permute.xlu0 %1195
    %v1198 = vmul.f32 %v1196, %v1193
    %v1199 = vadd.f32 %v1192, %v1198
    %v1200 = vld [vmem:[%s0 + $0x62] ss:$0 sm:$0xff]
    %1201 = vset.pattern.permute.xlu0 4
    %1202 = vperm.xlu0 %1201, %v1169
    %v1203 = vpop.permute.xlu0 %1202
    %v1205 = vmul.f32 %v1203, %v1200
    %v1206 = vadd.f32 %v1199, %v1205
    %v1207 = vld [vmem:[%s0 + $0x63] ss:$0 sm:$0xff]
    %1208 = vset.pattern.permute.xlu0 5
    %1209 = vperm.xlu0 %1208, %v1169
    %v1210 = vpop.permute.xlu0 %1209
    %v1212 = vmul.f32 %v1210, %v1207
    %v1213 = vadd.f32 %v1206, %v1212
    %v1214 = vld [vmem:[%s0 + $0x64] ss:$0 sm:$0xff]
    %1215 = vset.pattern.permute.xlu0 6
    %1216 = vperm.xlu0 %1215, %v1169
    %v1217 = vpop.permute.xlu0 %1216
    %v1219 = vmul.f32 %v1217, %v1214
    %v1220 = vadd.f32 %v1213, %v1219
    %v1221 = vld [vmem:[%s0 + $0x65] ss:$0 sm:$0xff]
    %1222 = vset.pattern.permute.xlu0 7
    %1223 = vperm.xlu0 %1222, %v1169
    %v1224 = vpop.permute.xlu0 %1223
    %v1226 = vmul.f32 %v1224, %v1221
    %v1227 = vadd.f32 %v1220, %v1226
    %v1228 = vmax.f32 %v1227, 0.0
    %v1229 = vld [vmem:[%s0 + $0x66] ss:$0 sm:$0xff]
    %v1230 = vmul.f32 %v1228, %v1229
    %vm1231 = vcmask 64512
    %v1232 = vsel %vm1231, %v1230, 0.0
    %1233 = vadd.xlane.f32.xlu0 %v1232
    %v1234 = vpop.xlane.xlu0 %1233
    %v1235 = vld [vmem:[%s0 + $0x47] ss:$0 sm:$0xff]
    %v1236 = vadd.f32 %v1234, %v1235
    %v1237 = vxor.u32 %v1236, 2147483648
    %v1238 = vmul.f32 %v1237, 1.442695
    %v1239 = vpow.pop %v1238
    %v1240 = vadd.f32 %v1239, 1.0
    %v1241 = vrcp.pop %v1240
    %v1242 = vmul.f32 1.0, %v1241
    %1244 = vrot.lane.b32.xlu0 %v1134, 4
    %v1245 = vpop.permute.xlu0 %1244
    %1248 = vrot.lane.b32.xlu0 %v1242, 6
    %v1249 = vpop.permute.xlu0 %1248
    %1252 = vrot.lane.b32.xlu0 %v1138, 7
    %v1253 = vpop.permute.xlu0 %1252
    %v1255 = vsel %vm197, %v219, %v1245
    %vm1256 = vcmask 48128
    %v1257 = vsel %vm1256, %v1255, %v1249
    %vm1258 = vcmask 56320
    %v1259 = vsel %vm1258, %v1257, %v1253
    %v1260 = vsel %vm1231, %v1259, 0.0
    %1261 = vst [vmem:[%s2] sm:$0xff] %v1260
    // Predicated region
    $region14: #{cgstvg_head.1} parent=1 // pred_check
      _
    $region15: #{cgstvg_head.1} parent=1 // pred_check_branch
      %1263 = sbr.rel (0) target = $region17
    $region16: #{cgstvg_head.1} parent=1 // pred_region
      _
    $region17: #{cgstvg_head.1} parent=1 // pred_fallthru
      _
    // Predicated region
    $region18: #{cgstvg_head.1} parent=1 // pred_check
      _
    $region19: #{cgstvg_head.1} parent=1 // pred_check_branch
      %1265 = sbr.rel (0) target = $region21
    $region20: #{cgstvg_head.1} parent=1 // pred_region
      _
    $region21: #{cgstvg_head.1} parent=1 // pred_fallthru
      _
    %1266 = vsyncpa [#allocation3], 1

</llo_original>
